<compile_context>
chip_gen: v6e
topology: v6e:2x2x1
jax: 0.10.0
libtpu: 0.0.40
codegen_flags: <defaults>
</compile_context>

<pallas_src>
import functools

import jax
import jax.numpy as jnp
from jax import lax
from jax.experimental import pallas as pl
from jax.experimental.pallas import tpu as pltpu


def _rup(x, m):
    return (x + m - 1) // m * m


# ---------------------------------------------------------------------------
# Fused path (stride == 1): tap-reduction conv + bias + PReLU, no HBM im2col.
# ---------------------------------------------------------------------------
def _fused_conv_prelu_kernel(x_ref, w_ref, b_ref, a_ref, o_ref, *, K, W_row):
    """One batch element per grid step.

    x_ref : (C_in, L_in)          padded image, row-major flat (compute dtype)
    w_ref : (K*K, C_out_p, C_in)  per-tap weight slices (resident)
    b_ref : (C_out_p, 1)          conv bias (f32)
    a_ref : (1, 1)                PReLU alpha in SMEM (f32)
    o_ref : (C_out_p, L_out)      lane-dense "wide" output, L_out = H_out*W_row
    """
    L_out = o_ref.shape[1]
    acc = jnp.zeros(o_ref.shape, jnp.float32)
    for kh in range(K):                                  # K*K unrolled taps
        for kw in range(K):
            t = kh * K + kw
            off = kh * W_row + kw                        # static flat tap offset
            x_tap = x_ref[:, off:off + L_out]            # contiguous VMEM slice
            acc = acc + jnp.dot(w_ref[t], x_tap,
                                preferred_element_type=jnp.float32)
    acc = acc + b_ref[...]                               # (C_out_p, 1) broadcast
    alpha = a_ref[0, 0]
    acc = jnp.where(acc >= 0, acc, alpha * acc)          # PReLU, f32 epilogue
    o_ref[...] = acc.astype(o_ref.dtype)


def _fused_forward(x, weight, bias, alpha, *, padding, compute_dtype, out_dtype):
    N, C_in, H, W = x.shape
    C_out, _, K, _ = weight.shape
    H_pad, W_pad = H + 2 * padding, W + 2 * padding
    H_out, W_out = H_pad - K + 1, W_pad - K + 1          # stride == 1
    C_out_p = _rup(C_out, 8)                             # unmasked sublane stores
    L_out = H_out * W_pad                                # wide (lane-dense) rows
    L_in = (H_pad + 1) * W_pad                           # +1 zero row: taps stay in-bounds

    # Cast at the source (review item #2): pad/flatten happen in compute dtype.
    x_c = x.astype(compute_dtype)
    x_flat = jnp.pad(
        x_c, ((0, 0), (0, 0), (padding, padding + 1), (padding, padding))
    ).reshape(N, C_in, L_in)

    # (K, K, C_out, C_in) -> (K*K, C_out_p, C_in): w_taps[kh*K+kw] = weight[:, :, kh, kw]
    w_taps = jnp.transpose(weight, (2, 3, 0, 1)).reshape(K * K, C_out, C_in)
    w_taps = jnp.pad(w_taps, ((0, 0), (0, C_out_p - C_out), (0, 0)))
    w_taps = w_taps.astype(compute_dtype)
    b_mat = jnp.pad(bias.astype(jnp.float32), (0, C_out_p - C_out)).reshape(C_out_p, 1)
    a_mat = jnp.reshape(alpha, (1, 1)).astype(jnp.float32)

    in_b = jnp.dtype(compute_dtype).itemsize
    out_b = jnp.dtype(out_dtype).itemsize

    cost = pl.CostEstimate(
        flops=int(2 * N * C_out * C_in * K * K * L_out),
        transcendentals=0,
        bytes_accessed=int(N * C_in * L_in * in_b
                           + K * K * C_out_p * C_in * in_b
                           + N * C_out_p * L_out * out_b))

    # VMEM budget: padded double-buffered blocks + f32 accumulator temporaries,
    # capped at 56 MiB so it fits inside v7x's 64 MiB per-core VMEM with headroom.
    sub_cin = _rup(C_in, 16 if in_b == 2 else 8)
    x_blk = sub_cin * _rup(L_in, 128) * in_b
    o_blk = C_out_p * _rup(L_out, 128) * out_b
    w_blk = K * K * C_out_p * 128 * in_b
    temps = 2 * C_out_p * _rup(L_out, 128) * 4 + sub_cin * _rup(L_out, 128) * in_b
    need = 2 * (x_blk + o_blk + w_blk + C_out_p * 128 * 4) + temps + (4 << 20)
    vmem_bytes = int(min(max(need, 8 << 20), 56 << 20))

    kernel = functools.partial(_fused_conv_prelu_kernel, K=K, W_row=W_pad)
    out_wide = pl.pallas_call(
        kernel,
        out_shape=jax.ShapeDtypeStruct((N, C_out_p, L_out), out_dtype),
        grid_spec=pltpu.PrefetchScalarGridSpec(
            num_scalar_prefetch=0,
            grid=(N,),
            in_specs=[
                pl.BlockSpec((None, C_in, L_in), lambda n: (n, 0, 0)),
                pl.BlockSpec((K * K, C_out_p, C_in), lambda n: (0, 0, 0)),
                pl.BlockSpec((C_out_p, 1), lambda n: (0, 0)),
                pl.BlockSpec(memory_space=pltpu.MemorySpace.SMEM),
            ],
            out_specs=pl.BlockSpec((None, C_out_p, L_out), lambda n: (n, 0, 0)),
        ),
        compiler_params=pltpu.CompilerParams(
            dimension_semantics=("parallel",),
            vmem_limit_bytes=vmem_bytes),
        cost_estimate=cost,
    )(x_flat, w_taps, b_mat, a_mat)

    # (N, C_out_p, H_out*W_pad) -> (N, C_out, H_out, W_out): reshape + slice only.
    out = out_wide.reshape(N, C_out_p, H_out, W_pad)
    return out[:, :C_out, :, :W_out]


# ---------------------------------------------------------------------------
# Fallback path (stride != 1, or image too large for whole-image VMEM blocks):
# tiled im2col matmul (previously validated).
# ---------------------------------------------------------------------------
def _patches_matmul_prelu_kernel(p_ref, w_ref, b_ref, a_ref, o_ref):
    acc = jnp.dot(w_ref[...], p_ref[...], preferred_element_type=jnp.float32)
    acc = acc + b_ref[...]
    alpha = a_ref[0, 0]
    acc = jnp.where(acc >= 0, acc, alpha * acc)
    o_ref[...] = acc.astype(o_ref.dtype)


def _pick_m_tile(M, max_tile=4096):
    """Largest lane-friendly M tile: full M if small, else a multiple of 128."""
    if M <= max_tile:
        return M
    for t in range(max_tile, 127, -128):
        if M % t == 0:
            return t
    return max_tile  # ragged last tile handled by masked stores


def _im2col_forward(x, weight, bias, alpha, *, stride, padding,
                    compute_dtype, out_dtype):
    N, C_in, H, W = x.shape
    C_out, _, K, _ = weight.shape
    H_out = (H + 2 * padding - K) // stride + 1
    W_out = (W + 2 * padding - K) // stride + 1
    M = H_out * W_out
    KKC = C_in * K * K

    x_c = x.astype(compute_dtype)                        # cast at source
    x_pad = jnp.pad(x_c, ((0, 0), (0, 0), (padding, padding), (padding, padding)))
    taps = []
    for kh in range(K):
        for kw in range(K):
            taps.append(x_pad[:, :,
                              kh:kh + (H_out - 1) * stride + 1:stride,
                              kw:kw + (W_out - 1) * stride + 1:stride])
    patches = jnp.stack(taps, axis=2).reshape(N, KKC, M)  # channel-major, tap-minor
    w_mat = weight.reshape(C_out, KKC).astype(compute_dtype)
    b_mat = bias.reshape(C_out, 1).astype(jnp.float32)
    a_mat = jnp.reshape(alpha, (1, 1)).astype(jnp.float32)

    tm = _pick_m_tile(M)
    grid = (N, pl.cdiv(M, tm))
    in_b = jnp.dtype(compute_dtype).itemsize
    out_b = jnp.dtype(out_dtype).itemsize

    cost = pl.CostEstimate(
        flops=int(2 * N * M * KKC * C_out), transcendentals=0,
        bytes_accessed=int((N * KKC * M + C_out * KKC) * in_b
                           + N * C_out * M * out_b))

    lanes_tm = _rup(tm, 128)
    need = (2 * (_rup(KKC, 8) * lanes_tm * in_b
                 + _rup(C_out, 8) * lanes_tm * out_b
                 + _rup(C_out, 8) * _rup(KKC, 128) * in_b
                 + _rup(C_out, 8) * 128 * 4)
            + _rup(C_out, 8) * lanes_tm * 4
            + (4 << 20))
    vmem_bytes = int(min(max(need, 8 << 20), 56 << 20))

    out = pl.pallas_call(
        _patches_matmul_prelu_kernel,
        out_shape=jax.ShapeDtypeStruct((N, C_out, M), out_dtype),
        grid_spec=pltpu.PrefetchScalarGridSpec(
            num_scalar_prefetch=0, grid=grid,
            in_specs=[
                pl.BlockSpec((None, KKC, tm), lambda n, j: (n, 0, j)),
                pl.BlockSpec((C_out, KKC), lambda n, j: (0, 0)),
                pl.BlockSpec((C_out, 1), lambda n, j: (0, 0)),
                pl.BlockSpec(memory_space=pltpu.MemorySpace.SMEM),
            ],
            out_specs=pl.BlockSpec((None, C_out, tm), lambda n, j: (n, 0, j)),
        ),
        compiler_params=pltpu.CompilerParams(
            dimension_semantics=("parallel", "parallel"),
            vmem_limit_bytes=vmem_bytes),
        cost_estimate=cost,
    )(patches, w_mat, b_mat, a_mat)
    return out.reshape(N, C_out, H_out, W_out)


# ---------------------------------------------------------------------------
# Public entry point: lidar_head.forward(x)  (NCHW Conv2d + PReLU)
# ---------------------------------------------------------------------------
def lidar_head_forward(x, weight, bias, prelu_alpha, *, stride, padding,
                       compute_dtype=None, out_dtype=None):
    """Conv2d(C_in->C_out, K, stride, padding) + PReLU on NCHW input.

    compute_dtype: MXU input dtype. Default bf16 (native 2x256 MXU on v6e/v7x,
                   halves input DMA bytes); accumulation/bias/PReLU stay f32.
                   Pass jnp.float32 for PyTorch-tight numerics.
    out_dtype:     output dtype (default x.dtype); bf16 halves writeback bytes.
    """
    if compute_dtype is None:
        compute_dtype = jnp.bfloat16   # perf default per review (f32 epilogue kept)
    if out_dtype is None:
        out_dtype = x.dtype

    N, C_in, H, W = x.shape
    C_out, C_in_w, K, K2 = weight.shape
    assert K == K2 and C_in_w == C_in

    use_fused = (stride == 1)
    if use_fused:
        H_pad, W_pad = H + 2 * padding, W + 2 * padding
        est = (2 * C_in * (H_pad + 1) * W_pad * jnp.dtype(compute_dtype).itemsize
               + 4 * _rup(C_out, 8) * max(H_pad - K + 1, 1) * W_pad * 4)
        use_fused = est <= (40 << 20)   # whole padded image per step must fit VMEM
        # TODO(synk): row-tile the fused path with a halo-strip manual DMA
        # (pltpu.make_async_copy) for images whose per-batch working set
        # exceeds VMEM, instead of falling back to the im2col path.

    if use_fused:
        return _fused_forward(x, weight, bias, prelu_alpha, padding=padding,
                              compute_dtype=compute_dtype, out_dtype=out_dtype)
    return _im2col_forward(x, weight, bias, prelu_alpha, stride=stride,
                           padding=padding, compute_dtype=compute_dtype,
                           out_dtype=out_dtype)


def _reference(x_nchw, weight_oihw, bias, prelu_alpha, *, stride, padding):
    """Pure-JAX reference of nn.Conv2d + nn.PReLU (NCHW)."""
    y = lax.conv_general_dilated(
        x_nchw, weight_oihw,
        window_strides=(stride, stride),
        padding=[(padding, padding), (padding, padding)],
        dimension_numbers=("NCHW", "OIHW", "NCHW"))
    y = y + bias[None, :, None, None]
    return jnp.where(y >= 0, y, prelu_alpha * y)


if __name__ == "__main__":
    # Module hyper-parameters (small, consistent with the forward pass).
    N, C_in, H, W = 2, 4, 16, 16
    C_out, K, stride, padding = 8, 3, 1, 1

    key = jax.random.PRNGKey(0)
    kx, kw, kb = jax.random.split(key, 3)

    # Deterministic parameter init (shapes from nn.Conv2d / nn.PReLU).
    fan_in = C_in * K * K
    bound = 1.0 / (fan_in ** 0.5)
    weight = jax.random.uniform(kw, (C_out, C_in, K, K), jnp.float32,
                                minval=-bound, maxval=bound)
    bias = jax.random.uniform(kb, (C_out,), jnp.float32,
                              minval=-bound, maxval=bound)
    prelu_alpha = jnp.float32(0.25)      # nn.PReLU() default init

    x = jax.random.normal(kx, (N, C_in, H, W), jnp.float32)

    ref = _reference(x, weight, bias, prelu_alpha, stride=stride, padding=padding)

    # f32 fused path (tight match to PyTorch semantics).
    run_f32 = jax.jit(functools.partial(lidar_head_forward, stride=stride,
                                        padding=padding,
                                        compute_dtype=jnp.float32))
    out_f32 = jax.block_until_ready(run_f32(x, weight, bias, prelu_alpha))
    assert out_f32.shape == (N, C_out, H, W), out_f32.shape
    assert jnp.allclose(out_f32, ref, rtol=1e-4, atol=1e-4), \
        float(jnp.max(jnp.abs(out_f32 - ref)))

    # Default path: bf16 MXU inputs, f32 accumulate + epilogue (perf setting).
    run_def = jax.jit(functools.partial(lidar_head_forward, stride=stride,
                                        padding=padding))
    out_def = jax.block_until_ready(run_def(x, weight, bias, prelu_alpha))
    assert out_def.shape == (N, C_out, H, W), out_def.shape
    assert jnp.allclose(out_def, ref, rtol=1e-1, atol=1e-1), \
        float(jnp.max(jnp.abs(out_def - ref)))

    # stride=2 exercises the tiled im2col fallback kernel (f32, tight check).
    ref2 = _reference(x, weight, bias, prelu_alpha, stride=2, padding=padding)
    run_s2 = jax.jit(functools.partial(lidar_head_forward, stride=2,
                                       padding=padding,
                                       compute_dtype=jnp.float32))
    out_s2 = jax.block_until_ready(run_s2(x, weight, bias, prelu_alpha))
    assert out_s2.shape == ref2.shape, out_s2.shape
    assert jnp.allclose(out_s2, ref2, rtol=1e-4, atol=1e-4), \
        float(jnp.max(jnp.abs(out_s2 - ref2)))

    print("KERNEL_OK")
</pallas_src>

<mosaic_0001>
module attributes {stable_mosaic.version = 11 : i64} {
  func.func @_fused_conv_prelu_kernel(%arg0: i32, %arg1: memref<1x4x342xf32, #tpu.memory_space<vmem>>, %arg2: memref<9x8x4xf32, #tpu.memory_space<vmem>>, %arg3: memref<8x1xf32, #tpu.memory_space<vmem>>, %arg4: memref<1x1xf32, #tpu.memory_space<smem>>, %arg5: memref<1x8x288xf32, #tpu.memory_space<vmem>>) attributes {dimension_semantics = [#tpu.dimension_semantics<parallel>], iteration_bounds = array<i64: 2>, scalar_prefetch = 0 : i64, scratch_operands = 0 : i64, tpu.core_type = #tpu.core_type<tc>, window_params = [{transform_indices = @transform_0, window_bounds = array<i64: 1, 4, 342>}, {pipeline_mode = #tpu.pipeline_mode<synchronous>, transform_indices = @transform_1, window_bounds = array<i64: 9, 8, 4>}, {pipeline_mode = #tpu.pipeline_mode<synchronous>, transform_indices = @transform_2, window_bounds = array<i64: 8, 1>}, {transform_indices = @transform_3, window_bounds = array<i64: 1, 1>}, {transform_indices = @transform_4, window_bounds = array<i64: 1, 8, 288>}]} {
    %cst = arith.constant 0.000000e+00 : f32
    %0 = vector.broadcast %cst : f32 to vector<8x288xf32>
    %c0 = arith.constant 0 : index
    %c0_0 = arith.constant 0 : index
    %c0_1 = arith.constant 0 : index
    %1 = vector.load %arg1[%c0, %c0_0, %c0_1] : memref<1x4x342xf32, #tpu.memory_space<vmem>>, vector<1x4x288xf32>
    %2 = vector.shape_cast %1 : vector<1x4x288xf32> to vector<4x288xf32>
    %c0_2 = arith.constant 0 : index
    %c0_3 = arith.constant 0 : index
    %c0_4 = arith.constant 0 : index
    %3 = vector.load %arg2[%c0_2, %c0_3, %c0_4] : memref<9x8x4xf32, #tpu.memory_space<vmem>>, vector<1x8x4xf32>
    %4 = vector.shape_cast %3 : vector<1x8x4xf32> to vector<8x4xf32>
    %cst_5 = arith.constant dense<0.000000e+00> : vector<8x288xf32>
    %5 = tpu.matmul %4, %2, %cst_5 {dimension_numbers = #tpu.dot_dimension_numbers<[1], [0], [0], [1], [0, 0, 1, 1], [], []>} : vector<8x4xf32>, vector<4x288xf32>, vector<8x288xf32> -> vector<8x288xf32>
    %6 = arith.addf %0, %5 : vector<8x288xf32>
    %c0_6 = arith.constant 0 : index
    %c0_7 = arith.constant 0 : index
    %c1 = arith.constant 1 : index
    %7 = vector.load %arg1[%c0_6, %c0_7, %c1] : memref<1x4x342xf32, #tpu.memory_space<vmem>>, vector<1x4x288xf32>
    %8 = vector.shape_cast %7 : vector<1x4x288xf32> to vector<4x288xf32>
    %c1_8 = arith.constant 1 : index
    %c0_9 = arith.constant 0 : index
    %c0_10 = arith.constant 0 : index
    %9 = vector.load %arg2[%c1_8, %c0_9, %c0_10] : memref<9x8x4xf32, #tpu.memory_space<vmem>>, vector<1x8x4xf32>
    %10 = vector.shape_cast %9 : vector<1x8x4xf32> to vector<8x4xf32>
    %cst_11 = arith.constant dense<0.000000e+00> : vector<8x288xf32>
    %11 = tpu.matmul %10, %8, %cst_11 {dimension_numbers = #tpu.dot_dimension_numbers<[1], [0], [0], [1], [0, 0, 1, 1], [], []>} : vector<8x4xf32>, vector<4x288xf32>, vector<8x288xf32> -> vector<8x288xf32>
    %12 = arith.addf %6, %11 : vector<8x288xf32>
    %c0_12 = arith.constant 0 : index
    %c0_13 = arith.constant 0 : index
    %c2 = arith.constant 2 : index
    %13 = vector.load %arg1[%c0_12, %c0_13, %c2] : memref<1x4x342xf32, #tpu.memory_space<vmem>>, vector<1x4x288xf32>
    %14 = vector.shape_cast %13 : vector<1x4x288xf32> to vector<4x288xf32>
    %c2_14 = arith.constant 2 : index
    %c0_15 = arith.constant 0 : index
    %c0_16 = arith.constant 0 : index
    %15 = vector.load %arg2[%c2_14, %c0_15, %c0_16] : memref<9x8x4xf32, #tpu.memory_space<vmem>>, vector<1x8x4xf32>
    %16 = vector.shape_cast %15 : vector<1x8x4xf32> to vector<8x4xf32>
    %cst_17 = arith.constant dense<0.000000e+00> : vector<8x288xf32>
    %17 = tpu.matmul %16, %14, %cst_17 {dimension_numbers = #tpu.dot_dimension_numbers<[1], [0], [0], [1], [0, 0, 1, 1], [], []>} : vector<8x4xf32>, vector<4x288xf32>, vector<8x288xf32> -> vector<8x288xf32>
    %18 = arith.addf %12, %17 : vector<8x288xf32>
    %c0_18 = arith.constant 0 : index
    %c0_19 = arith.constant 0 : index
    %c18 = arith.constant 18 : index
    %19 = vector.load %arg1[%c0_18, %c0_19, %c18] : memref<1x4x342xf32, #tpu.memory_space<vmem>>, vector<1x4x288xf32>
    %20 = vector.shape_cast %19 : vector<1x4x288xf32> to vector<4x288xf32>
    %c3 = arith.constant 3 : index
    %c0_20 = arith.constant 0 : index
    %c0_21 = arith.constant 0 : index
    %21 = vector.load %arg2[%c3, %c0_20, %c0_21] : memref<9x8x4xf32, #tpu.memory_space<vmem>>, vector<1x8x4xf32>
    %22 = vector.shape_cast %21 : vector<1x8x4xf32> to vector<8x4xf32>
    %cst_22 = arith.constant dense<0.000000e+00> : vector<8x288xf32>
    %23 = tpu.matmul %22, %20, %cst_22 {dimension_numbers = #tpu.dot_dimension_numbers<[1], [0], [0], [1], [0, 0, 1, 1], [], []>} : vector<8x4xf32>, vector<4x288xf32>, vector<8x288xf32> -> vector<8x288xf32>
    %24 = arith.addf %18, %23 : vector<8x288xf32>
    %c0_23 = arith.constant 0 : index
    %c0_24 = arith.constant 0 : index
    %c19 = arith.constant 19 : index
    %25 = vector.load %arg1[%c0_23, %c0_24, %c19] : memref<1x4x342xf32, #tpu.memory_space<vmem>>, vector<1x4x288xf32>
    %26 = vector.shape_cast %25 : vector<1x4x288xf32> to vector<4x288xf32>
    %c4 = arith.constant 4 : index
    %c0_25 = arith.constant 0 : index
    %c0_26 = arith.constant 0 : index
    %27 = vector.load %arg2[%c4, %c0_25, %c0_26] : memref<9x8x4xf32, #tpu.memory_space<vmem>>, vector<1x8x4xf32>
    %28 = vector.shape_cast %27 : vector<1x8x4xf32> to vector<8x4xf32>
    %cst_27 = arith.constant dense<0.000000e+00> : vector<8x288xf32>
    %29 = tpu.matmul %28, %26, %cst_27 {dimension_numbers = #tpu.dot_dimension_numbers<[1], [0], [0], [1], [0, 0, 1, 1], [], []>} : vector<8x4xf32>, vector<4x288xf32>, vector<8x288xf32> -> vector<8x288xf32>
    %30 = arith.addf %24, %29 : vector<8x288xf32>
    %c0_28 = arith.constant 0 : index
    %c0_29 = arith.constant 0 : index
    %c20 = arith.constant 20 : index
    %31 = vector.load %arg1[%c0_28, %c0_29, %c20] : memref<1x4x342xf32, #tpu.memory_space<vmem>>, vector<1x4x288xf32>
    %32 = vector.shape_cast %31 : vector<1x4x288xf32> to vector<4x288xf32>
    %c5 = arith.constant 5 : index
    %c0_30 = arith.constant 0 : index
    %c0_31 = arith.constant 0 : index
    %33 = vector.load %arg2[%c5, %c0_30, %c0_31] : memref<9x8x4xf32, #tpu.memory_space<vmem>>, vector<1x8x4xf32>
    %34 = vector.shape_cast %33 : vector<1x8x4xf32> to vector<8x4xf32>
    %cst_32 = arith.constant dense<0.000000e+00> : vector<8x288xf32>
    %35 = tpu.matmul %34, %32, %cst_32 {dimension_numbers = #tpu.dot_dimension_numbers<[1], [0], [0], [1], [0, 0, 1, 1], [], []>} : vector<8x4xf32>, vector<4x288xf32>, vector<8x288xf32> -> vector<8x288xf32>
    %36 = arith.addf %30, %35 : vector<8x288xf32>
    %c0_33 = arith.constant 0 : index
    %c0_34 = arith.constant 0 : index
    %c36 = arith.constant 36 : index
    %37 = vector.load %arg1[%c0_33, %c0_34, %c36] : memref<1x4x342xf32, #tpu.memory_space<vmem>>, vector<1x4x288xf32>
    %38 = vector.shape_cast %37 : vector<1x4x288xf32> to vector<4x288xf32>
    %c6 = arith.constant 6 : index
    %c0_35 = arith.constant 0 : index
    %c0_36 = arith.constant 0 : index
    %39 = vector.load %arg2[%c6, %c0_35, %c0_36] : memref<9x8x4xf32, #tpu.memory_space<vmem>>, vector<1x8x4xf32>
    %40 = vector.shape_cast %39 : vector<1x8x4xf32> to vector<8x4xf32>
    %cst_37 = arith.constant dense<0.000000e+00> : vector<8x288xf32>
    %41 = tpu.matmul %40, %38, %cst_37 {dimension_numbers = #tpu.dot_dimension_numbers<[1], [0], [0], [1], [0, 0, 1, 1], [], []>} : vector<8x4xf32>, vector<4x288xf32>, vector<8x288xf32> -> vector<8x288xf32>
    %42 = arith.addf %36, %41 : vector<8x288xf32>
    %c0_38 = arith.constant 0 : index
    %c0_39 = arith.constant 0 : index
    %c37 = arith.constant 37 : index
    %43 = vector.load %arg1[%c0_38, %c0_39, %c37] : memref<1x4x342xf32, #tpu.memory_space<vmem>>, vector<1x4x288xf32>
    %44 = vector.shape_cast %43 : vector<1x4x288xf32> to vector<4x288xf32>
    %c7 = arith.constant 7 : index
    %c0_40 = arith.constant 0 : index
    %c0_41 = arith.constant 0 : index
    %45 = vector.load %arg2[%c7, %c0_40, %c0_41] : memref<9x8x4xf32, #tpu.memory_space<vmem>>, vector<1x8x4xf32>
    %46 = vector.shape_cast %45 : vector<1x8x4xf32> to vector<8x4xf32>
    %cst_42 = arith.constant dense<0.000000e+00> : vector<8x288xf32>
    %47 = tpu.matmul %46, %44, %cst_42 {dimension_numbers = #tpu.dot_dimension_numbers<[1], [0], [0], [1], [0, 0, 1, 1], [], []>} : vector<8x4xf32>, vector<4x288xf32>, vector<8x288xf32> -> vector<8x288xf32>
    %48 = arith.addf %42, %47 : vector<8x288xf32>
    %c0_43 = arith.constant 0 : index
    %c0_44 = arith.constant 0 : index
    %c38 = arith.constant 38 : index
    %49 = vector.load %arg1[%c0_43, %c0_44, %c38] : memref<1x4x342xf32, #tpu.memory_space<vmem>>, vector<1x4x288xf32>
    %50 = vector.shape_cast %49 : vector<1x4x288xf32> to vector<4x288xf32>
    %c8 = arith.constant 8 : index
    %c0_45 = arith.constant 0 : index
    %c0_46 = arith.constant 0 : index
    %51 = vector.load %arg2[%c8, %c0_45, %c0_46] : memref<9x8x4xf32, #tpu.memory_space<vmem>>, vector<1x8x4xf32>
    %52 = vector.shape_cast %51 : vector<1x8x4xf32> to vector<8x4xf32>
    %cst_47 = arith.constant dense<0.000000e+00> : vector<8x288xf32>
    %53 = tpu.matmul %52, %50, %cst_47 {dimension_numbers = #tpu.dot_dimension_numbers<[1], [0], [0], [1], [0, 0, 1, 1], [], []>} : vector<8x4xf32>, vector<4x288xf32>, vector<8x288xf32> -> vector<8x288xf32>
    %54 = arith.addf %48, %53 : vector<8x288xf32>
    %c0_48 = arith.constant 0 : index
    %c0_49 = arith.constant 0 : index
    %55 = vector.load %arg3[%c0_48, %c0_49] : memref<8x1xf32, #tpu.memory_space<vmem>>, vector<8x1xf32>
    %56 = vector.broadcast %55 : vector<8x1xf32> to vector<8x288xf32>
    %57 = arith.addf %54, %56 : vector<8x288xf32>
    %c0_50 = arith.constant 0 : index
    %c0_51 = arith.constant 0 : index
    %58 = memref.load %arg4[%c0_50, %c0_51] : memref<1x1xf32, #tpu.memory_space<smem>>
    %cst_52 = arith.constant 0.000000e+00 : f32
    %59 = vector.broadcast %cst_52 : f32 to vector<8x288xf32>
    %60 = arith.cmpf oge, %57, %59 : vector<8x288xf32>
    %61 = vector.broadcast %58 : f32 to vector<8x288xf32>
    %62 = arith.mulf %61, %57 : vector<8x288xf32>
    %63 = arith.select %60, %57, %62 : vector<8x288xi1>, vector<8x288xf32>
    %c0_53 = arith.constant 0 : index
    %c0_54 = arith.constant 0 : index
    %c0_55 = arith.constant 0 : index
    %64 = vector.load %arg5[%c0_53, %c0_54, %c0_55] : memref<1x8x288xf32, #tpu.memory_space<vmem>>, vector<1x8x288xf32>
    %65 = vector.shape_cast %64 : vector<1x8x288xf32> to vector<8x288xf32>
    %66 = vector.shape_cast %63 : vector<8x288xf32> to vector<1x8x288xf32>
    tpu.vector_store %arg5[%c0_53, %c0_54, %c0_55], %66 {strides = array<i32>} : memref<1x8x288xf32, #tpu.memory_space<vmem>>, vector<1x8x288xf32>,
    return
  }
  func.func @transform_0(%arg0: i32) -> (i32, i32, i32) {
    %c0_i32 = arith.constant 0 : i32
    %c0_i32_0 = arith.constant 0 : i32
    %c0_i32_1 = arith.constant 0 : i32
    return %arg0, %c0_i32, %c0_i32_0 : i32, i32, i32
  }
  func.func @transform_1(%arg0: i32) -> (i32, i32, i32) {
    %c0_i32 = arith.constant 0 : i32
    %c0_i32_0 = arith.constant 0 : i32
    %c0_i32_1 = arith.constant 0 : i32
    %c0_i32_2 = arith.constant 0 : i32
    return %c0_i32, %c0_i32_0, %c0_i32_1 : i32, i32, i32
  }
  func.func @transform_2(%arg0: i32) -> (i32, i32) {
    %c0_i32 = arith.constant 0 : i32
    %c0_i32_0 = arith.constant 0 : i32
    %c0_i32_1 = arith.constant 0 : i32
    return %c0_i32, %c0_i32_0 : i32, i32
  }
  func.func @transform_3(%arg0: i32) -> (i32, i32) {
    %c0_i32 = arith.constant 0 : i32
    %c0_i32_0 = arith.constant 0 : i32
    %c0_i32_1 = arith.constant 0 : i32
    return %c0_i32, %c0_i32_0 : i32, i32
  }
  func.func @transform_4(%arg0: i32) -> (i32, i32, i32) {
    %c0_i32 = arith.constant 0 : i32
    %c0_i32_0 = arith.constant 0 : i32
    %c0_i32_1 = arith.constant 0 : i32
    return %arg0, %c0_i32, %c0_i32_0 : i32, i32, i32
  }
}

</mosaic_0001>

<llo_original>
// kernel: lidar_head_forward.1
$region0: #{lidar_head_forward.1}
  #allocation0 [shape = 'u32[]', space=smem, size = 0x4, offset = 0x4, fixed_abs, tag = 'smem constant byte address 0x4 - core index']
  #allocation1 [shape = 'u32[144,128]{1,0:T(1,128)}', space=vmem, size = 0x12000, scoped, tag = 'internal scratch']
  #allocation2 [shape = 'f32[1,1]{1,0:T(1,128)S(6)}', space=smem, size = 0x200, scoped, tag = 'scoped memory for lidar_head_forward.1']
  %s0 = inlined_call_operand.vmem [shape: f32[2,4,342], index: 0, kind: input, shape index: {}]
  %s1 = inlined_call_operand.vmem [shape: f32[9,8,4], index: 1, kind: input, shape index: {}]
  %s2 = inlined_call_operand.vmem [shape: f32[8,1], index: 2, kind: input, shape index: {}]
  %s3 = inlined_call_operand.<no memory space> [shape: f32[1,1], index: 3, kind: input, shape index: {}]
  %s4 = inlined_call_operand.vmem [shape: f32[2,8,288], index: 4, kind: output, shape index: {}]
  %s5 = sld [smem:[#allocation0]]
  $region49: #{lidar_head_forward.1} parent=0
    _
  %s7 = ssub.s32 1, %s5
  %s8 = scalar_select 0, %s7, %s5
  %9 = sst [smem:[#allocation2]] %s3
  loop: start=0, step=1, limit=4
  $region2: #{lidar_head_forward.1} parent=0 // loop_pre_header
    _
  $region3: #{lidar_head_forward.1} parent=0 // loop_header
    %s11 = sphi 0, %s15
    %p12 = scmp.ge.s32.totalorder %s11, 4
    %s21 = sphi 0, %s23
    %s24 = sphi 0, %s21
    %s25 = sphi 0, %s24
    %s41 = sphi 0, %s25
    %s45 = sphi 0, %s45
    %s47 = sphi 0, %s45
    %s48 = sphi 0, %s47
    %s62 = sphi 0, %s48
    %s66 = sphi 0, %s66
    %s68 = sphi 0, %s66
    %s69 = sphi 0, %s68
    %s83 = sphi 0, %s69
    %s87 = sphi 0, %s87
    %s89 = sphi 0, %s87
    %s90 = sphi 0, %s89
    %s104 = sphi 0, %s90
    %s110 = sphi 0, %s112
    %s113 = sphi 0, %s110
    %s114 = sphi 0, %s113
    %s130 = sphi 0, %s114
  $region4: #{lidar_head_forward.1} parent=0 // loop_header_branch
    %14 = sbr.rel (%p12) target = $region8
  $region5: #{lidar_head_forward.1} parent=0 // loop_body
    %s16 = ssub.s32 %s11, 1
    %s17 = ssub.s32 %s11, 2
    %s18 = sadd.s32 %s11, 1
    %s19 = ssub.s32 %s11, %s18
    %p20 = scmp.eq.s32.totalorder %s19, 0
    %s22 = sadd.s32 %s21, 1
    %s23 = scalar_select %p20, %s21, %s22
    %p26 = pneg %p20
    %p27 = scmp.eq.s32.totalorder %s11, 1
    %p28 = por %p26, %p27
    %p29 = scmp.ne.s32.totalorder %s21, %s24
    %p30 = scmp.eq.s32.totalorder %s11, 0
    %p31 = por %p29, %p30
    %p32 = scmp.ne.s32.totalorder %s21, %s24
    %p33 = scmp.eq.s32.totalorder %s16, 1
    %p34 = por %p32, %p33
    %p35 = scmp.ne.s32.totalorder %s24, %s25
    %p36 = scmp.eq.s32.totalorder %s16, 0
    %p37 = por %p35, %p36
    %p38 = scmp.ne.s32.totalorder %s24, %s25
    %p39 = scmp.eq.s32.totalorder %s17, 1
    %p40 = por %p38, %p39
    %p42 = scmp.ne.s32.totalorder %s25, %s41
    %p43 = scmp.eq.s32.totalorder %s17, 0
    %p44 = por %p42, %p43
    %s46 = sadd.s32 %s45, 1
    %p49 = scmp.eq.s32.totalorder %s11, 1
    %p50 = scmp.ne.s32.totalorder %s45, %s47
    %p51 = scmp.eq.s32.totalorder %s11, 0
    %p52 = por %p50, %p51
    %p53 = scmp.ne.s32.totalorder %s45, %s47
    %p54 = scmp.eq.s32.totalorder %s16, 1
    %p55 = por %p53, %p54
    %p56 = scmp.ne.s32.totalorder %s47, %s48
    %p57 = scmp.eq.s32.totalorder %s16, 0
    %p58 = por %p56, %p57
    %p59 = scmp.ne.s32.totalorder %s47, %s48
    %p60 = scmp.eq.s32.totalorder %s17, 1
    %p61 = por %p59, %p60
    %p63 = scmp.ne.s32.totalorder %s48, %s62
    %p64 = scmp.eq.s32.totalorder %s17, 0
    %p65 = por %p63, %p64
    %s67 = sadd.s32 %s66, 1
    %p70 = scmp.eq.s32.totalorder %s11, 1
    %p71 = scmp.ne.s32.totalorder %s66, %s68
    %p72 = scmp.eq.s32.totalorder %s11, 0
    %p73 = por %p71, %p72
    %p74 = scmp.ne.s32.totalorder %s66, %s68
    %p75 = scmp.eq.s32.totalorder %s16, 1
    %p76 = por %p74, %p75
    %p77 = scmp.ne.s32.totalorder %s68, %s69
    %p78 = scmp.eq.s32.totalorder %s16, 0
    %p79 = por %p77, %p78
    %p80 = scmp.ne.s32.totalorder %s68, %s69
    %p81 = scmp.eq.s32.totalorder %s17, 1
    %p82 = por %p80, %p81
    %p84 = scmp.ne.s32.totalorder %s69, %s83
    %p85 = scmp.eq.s32.totalorder %s17, 0
    %p86 = por %p84, %p85
    %s88 = sadd.s32 %s87, 1
    %p91 = scmp.eq.s32.totalorder %s11, 1
    %p92 = scmp.ne.s32.totalorder %s87, %s89
    %p93 = scmp.eq.s32.totalorder %s11, 0
    %p94 = por %p92, %p93
    %p95 = scmp.ne.s32.totalorder %s87, %s89
    %p96 = scmp.eq.s32.totalorder %s16, 1
    %p97 = por %p95, %p96
    %p98 = scmp.ne.s32.totalorder %s89, %s90
    %p99 = scmp.eq.s32.totalorder %s16, 0
    %p100 = por %p98, %p99
    %p101 = scmp.ne.s32.totalorder %s89, %s90
    %p102 = scmp.eq.s32.totalorder %s17, 1
    %p103 = por %p101, %p102
    %p105 = scmp.ne.s32.totalorder %s90, %s104
    %p106 = scmp.eq.s32.totalorder %s17, 0
    %p107 = por %p105, %p106
    %s108 = ssub.s32 %s11, %s18
    %p109 = scmp.eq.s32.totalorder %s108, 0
    %s111 = sadd.s32 %s110, 1
    %s112 = scalar_select %p109, %s110, %s111
    %p115 = pneg %p109
    %p116 = scmp.eq.s32.totalorder %s11, 1
    %p117 = por %p115, %p116
    %p118 = scmp.ne.s32.totalorder %s110, %s113
    %p119 = scmp.eq.s32.totalorder %s11, 0
    %p120 = por %p118, %p119
    %p121 = scmp.ne.s32.totalorder %s110, %s113
    %p122 = scmp.eq.s32.totalorder %s16, 1
    %p123 = por %p121, %p122
    %p124 = scmp.ne.s32.totalorder %s113, %s114
    %p125 = scmp.eq.s32.totalorder %s16, 0
    %p126 = por %p124, %p125
    %p127 = scmp.ne.s32.totalorder %s113, %s114
    %p128 = scmp.eq.s32.totalorder %s17, 1
    %p129 = por %p127, %p128
    %p131 = scmp.ne.s32.totalorder %s114, %s130
    %p132 = scmp.eq.s32.totalorder %s17, 0
    %p133 = por %p131, %p132
    %p134 = scmp.le.s32.totalorder 1, %s11
    %p135 = scmp.lt.s32.totalorder %s11, 3
    %p136 = pnand %p134, %p135
    %p137 = pneg %p136
    // Predicated region
    $region9: #{lidar_head_forward.1} parent=5 // pred_check
      _
    $region10: #{lidar_head_forward.1} parent=5 // pred_check_branch
      %139 = sbr.rel (%p136) target = $region12
    $region11: #{lidar_head_forward.1} parent=5 // pred_region
      %s140 = ssub.s32 %s11, 1
      // Predicated region
      $region13: #{lidar_head_forward.1} parent=11 // pred_check
        %p141 = pneg %p58
      $region14: #{lidar_head_forward.1} parent=11 // pred_check_branch
        %143 = sbr.rel (%p141) target = $region16
      $region15: #{lidar_head_forward.1} parent=11 // pred_region
        _
      $region16: #{lidar_head_forward.1} parent=11 // pred_fallthru
        _
      // Predicated region
      $region17: #{lidar_head_forward.1} parent=11 // pred_check
        %p144 = pneg %p79
      $region18: #{lidar_head_forward.1} parent=11 // pred_check_branch
        %146 = sbr.rel (%p144) target = $region20
      $region19: #{lidar_head_forward.1} parent=11 // pred_region
        _
      $region20: #{lidar_head_forward.1} parent=11 // pred_fallthru
        _
      // Predicated region
      $region21: #{lidar_head_forward.1} parent=11 // pred_check
        %p147 = pneg %p100
      $region22: #{lidar_head_forward.1} parent=11 // pred_check_branch
        %149 = sbr.rel (%p147) target = $region24
      $region23: #{lidar_head_forward.1} parent=11 // pred_region
        _
      $region24: #{lidar_head_forward.1} parent=11 // pred_fallthru
        _
    $region12: #{lidar_head_forward.1} parent=5 // pred_fallthru
      _
    %p150 = scmp.lt.s32.totalorder %s11, 2
    // Predicated region
    $region25: #{lidar_head_forward.1} parent=5 // pred_check
      %p151 = pneg %p150
    $region26: #{lidar_head_forward.1} parent=5 // pred_check_branch
      %153 = sbr.rel (%p151) target = $region28
    $region27: #{lidar_head_forward.1} parent=5 // pred_region
      // Predicated region
      $region29: #{lidar_head_forward.1} parent=27 // pred_check
        %p154 = pneg %p31
      $region30: #{lidar_head_forward.1} parent=27 // pred_check_branch
        %156 = sbr.rel (%p154) target = $region32
      $region31: #{lidar_head_forward.1} parent=27 // pred_region
        %p157 = scmp.lt.s32.totalorder %s11, 1
        %s158 = scalar_select %p157, %s11, 1
        %s159 = smul.addr %s158, 3
        %s160 = smul.addr %s159, 4
        %s161 = scalar_lea.vmem %s0, %s160
      $region32: #{lidar_head_forward.1} parent=27 // pred_fallthru
        _
    $region28: #{lidar_head_forward.1} parent=5 // pred_fallthru
      _
    %p162 = scmp.le.s32.totalorder 1, %s11
    %p163 = scmp.lt.s32.totalorder %s11, 3
    %p164 = pnand %p162, %p163
    %p165 = pneg %p164
    // Predicated region
    $region33: #{lidar_head_forward.1} parent=5 // pred_check
      _
    $region34: #{lidar_head_forward.1} parent=5 // pred_check_branch
      %167 = sbr.rel (%p164) target = $region36
    $region35: #{lidar_head_forward.1} parent=5 // pred_region
      %s168 = ssub.s32 %s11, 1
      %p169 = scmp.lt.s32.totalorder %s16, 1
      %s170 = scalar_select %p169, %s16, 1
      %s171 = smul.addr %s170, 3
      %s172 = smul.addr %s171, 4
      %s173 = scalar_lea.vmem %s0, %s172
      %p174 = pneg %p37
      %p175 = pneg %p34
      %p176 = pneg %p58
      %p177 = pneg %p55
      %p178 = pneg %p79
      %p179 = pneg %p76
      %p180 = pneg %p100
      %p181 = pneg %p97
      %p182 = pneg %p126
      %p183 = pneg %p123
      %p184 = scmp.lt.s32.totalorder %s16, 1
      %s185 = scalar_select %p184, %s16, 1
      %s186 = smul.addr %s185, 3
      %s187 = smul.addr %s186, 8
      %s188 = scalar_lea.vmem %s4, %s187
      %p189 = scmp.lt.s32.totalorder %s16, 1
      %s190 = scalar_select %p189, %s16, 1
      %s191 = smul.addr %s190, 3
      %s192 = smul.addr %s191, 4
      %s193 = scalar_lea.vmem %s0, %s192
      %p194 = scmp.lt.s32.totalorder %s16, 1
      %s195 = scalar_select %p194, %s16, 1
      %s196 = smul.addr %s195, 3
      %s197 = smul.addr %s196, 8
      %s198 = scalar_lea.vmem %s4, %s197
      %v199 = vld [vmem:[%s193] sm:$0xff]
      %v200 = vld [vmem:[%s193 + $0x8] sm:$0xf]
      %v201 = vld [vmem:[%s1] sm:$0xff]
      %s202 = scalar_lea.vmem %s1, 8
      %v203 = vld [vmem:[%s202] sm:$0xff]
      %v206 = vcombine.high %v199, %v199
      %207 = vrot.lane.b32.xlu0 %v199, 127
      %v208 = vpop.permute.xlu0 %207
      %209 = vrot.lane.b32.xlu0 %v206, 127
      %v210 = vpop.permute.xlu0 %209
      %211 = vrot.lane.b32.xlu0 %v200, 127
      %v212 = vpop.permute.xlu0 %211
      %vm213 = vcmask 1039360
      %v214 = vsel %vm213, %v208, %v210
      %v215 = vsel %vm213, %v210, %v212
      %vm216 = vcmask 31744
      %v218 = vsel %vm216, %v203, 0
      %vm220 = vcmask 1043456
      %v221 = vsel %vm220, %v214, 0
      %v223 = vsel %vm220, %v215, 0
      %v225 = vsel %vm220, %v212, 0
      %227 = vmatprep.subr.mxu0 0.0
      %228 = vmatpush1.msra.mxu0 0.0
      %229 = vmatprep.subr.mxu0 0.0
      %230 = vmatpush1.msra.mxu0 0.0
      %231 = vmatprep.subr.mxu0 0.0
      %232 = vmatpush1.msra.mxu0 0.0
      %233 = vmatprep.subr.mxu0 0.0
      %234 = vmatpush1.msra.mxu0 0.0
      %235 = vmatprep.subr.mxu0 0.0
      %236 = vmatpush1.msra.mxu0 0.0
      %237 = vmatprep.subr.mxu0 0.0
      %238 = vmatpush1.msra.mxu0 0.0
      %239 = vmatprep.subr.mxu0 0.0
      %240 = vmatpush1.msra.mxu0 0.0
      %241 = vmatprep.subr.mxu0 0.0
      %242 = vmatpush1.msra.mxu0 0.0
      %243 = vmatprep.subr.mxu0 0.0
      %244 = vmatpush1.msra.mxu0 0.0
      %245 = vmatprep.subr.mxu0 0.0
      %246 = vmatpush1.msra.mxu0 0.0
      %247 = vmatprep.subr.mxu0 0.0
      %248 = vmatpush1.msra.mxu0 0.0
      %249 = vmatprep.subr.mxu0 0.0
      %250 = vmatpush1.msra.mxu0 0.0
      %251 = vmatprep.subr.mxu0 0.0
      %252 = vmatpush1.msra.mxu0 0.0
      %253 = vmatprep.subr.mxu0 0.0
      %254 = vmatpush1.msra.mxu0 0.0
      %255 = vmatprep.subr.mxu0 0.0
      %256 = vmatpush1.msra.mxu0 0.0
      %257 = vmatprep.subr.mxu0 %v223
      %258 = vmatpush1.msra.mxu0 %v221
      %259 = vmatprep.subr.mxu0 0.0
      %260 = vmatpush2.msra.mxu0 0.0
      %261 = vmatprep.subr.mxu0 0.0
      %262 = vmatpush2.msra.mxu0 0.0
      %263 = vmatprep.subr.mxu0 0.0
      %264 = vmatpush2.msra.mxu0 0.0
      %265 = vmatprep.subr.mxu0 0.0
      %266 = vmatpush2.msra.mxu0 0.0
      %267 = vmatprep.subr.mxu0 0.0
      %268 = vmatpush2.msra.mxu0 0.0
      %269 = vmatprep.subr.mxu0 0.0
      %270 = vmatpush2.msra.mxu0 0.0
      %271 = vmatprep.subr.mxu0 0.0
      %272 = vmatpush2.msra.mxu0 0.0
      %273 = vmatprep.subr.mxu0 0.0
      %274 = vmatpush2.msra.mxu0 0.0
      %275 = vmatprep.subr.mxu0 0.0
      %276 = vmatpush2.msra.mxu0 0.0
      %277 = vmatprep.subr.mxu0 0.0
      %278 = vmatpush2.msra.mxu0 0.0
      %279 = vmatprep.subr.mxu0 0.0
      %280 = vmatpush2.msra.mxu0 0.0
      %281 = vmatprep.subr.mxu0 0.0
      %282 = vmatpush2.msra.mxu0 0.0
      %283 = vmatprep.subr.mxu0 0.0
      %284 = vmatpush2.msra.mxu0 0.0
      %285 = vmatprep.subr.mxu0 0.0
      %286 = vmatpush2.msra.mxu0 0.0
      %287 = vmatprep.subr.mxu0 0.0
      %288 = vmatpush2.msra.mxu0 0.0
      %289 = vmatprep.subr.mxu0 0.0
      %290 = vmatpush2.msra.mxu0 0.0
      %291 = vmatprep.mubr.f32.mxu0 0.0
      %292 = vmatmul.mubr.f32.gmra.mxu0 %v218
      %v293 = vpop.f32.mrf.mxu0
      %v294 = vadd.f32 0.0, %v293
      %v295 = vpop.f32.mrf.mxu0
      %v296 = vadd.f32 0.0, %v295
      %297 = vdwg.mxu0
      %298 = vmatprep.subr.mxu0 0.0
      %299 = vmatpush1.msra.mxu0 0.0
      %300 = vmatprep.subr.mxu0 0.0
      %301 = vmatpush1.msra.mxu0 0.0
      %302 = vmatprep.subr.mxu0 0.0
      %303 = vmatpush1.msra.mxu0 0.0
      %304 = vmatprep.subr.mxu0 0.0
      %305 = vmatpush1.msra.mxu0 0.0
      %306 = vmatprep.subr.mxu0 0.0
      %307 = vmatpush1.msra.mxu0 0.0
      %308 = vmatprep.subr.mxu0 0.0
      %309 = vmatpush1.msra.mxu0 0.0
      %310 = vmatprep.subr.mxu0 0.0
      %311 = vmatpush1.msra.mxu0 0.0
      %312 = vmatprep.subr.mxu0 0.0
      %313 = vmatpush1.msra.mxu0 0.0
      %314 = vmatprep.subr.mxu0 0.0
      %315 = vmatpush1.msra.mxu0 0.0
      %316 = vmatprep.subr.mxu0 0.0
      %317 = vmatpush1.msra.mxu0 0.0
      %318 = vmatprep.subr.mxu0 0.0
      %319 = vmatpush1.msra.mxu0 0.0
      %320 = vmatprep.subr.mxu0 0.0
      %321 = vmatpush1.msra.mxu0 0.0
      %322 = vmatprep.subr.mxu0 0.0
      %323 = vmatpush1.msra.mxu0 0.0
      %324 = vmatprep.subr.mxu0 0.0
      %325 = vmatpush1.msra.mxu0 0.0
      %326 = vmatprep.subr.mxu0 0.0
      %327 = vmatpush1.msra.mxu0 0.0
      %328 = vmatprep.subr.mxu0 0.0
      %329 = vmatpush1.msra.mxu0 %v225
      %330 = vmatprep.subr.mxu0 0.0
      %331 = vmatpush2.msra.mxu0 0.0
      %332 = vmatprep.subr.mxu0 0.0
      %333 = vmatpush2.msra.mxu0 0.0
      %334 = vmatprep.subr.mxu0 0.0
      %335 = vmatpush2.msra.mxu0 0.0
      %336 = vmatprep.subr.mxu0 0.0
      %337 = vmatpush2.msra.mxu0 0.0
      %338 = vmatprep.subr.mxu0 0.0
      %339 = vmatpush2.msra.mxu0 0.0
      %340 = vmatprep.subr.mxu0 0.0
      %341 = vmatpush2.msra.mxu0 0.0
      %342 = vmatprep.subr.mxu0 0.0
      %343 = vmatpush2.msra.mxu0 0.0
      %344 = vmatprep.subr.mxu0 0.0
      %345 = vmatpush2.msra.mxu0 0.0
      %346 = vmatprep.subr.mxu0 0.0
      %347 = vmatpush2.msra.mxu0 0.0
      %348 = vmatprep.subr.mxu0 0.0
      %349 = vmatpush2.msra.mxu0 0.0
      %350 = vmatprep.subr.mxu0 0.0
      %351 = vmatpush2.msra.mxu0 0.0
      %352 = vmatprep.subr.mxu0 0.0
      %353 = vmatpush2.msra.mxu0 0.0
      %354 = vmatprep.subr.mxu0 0.0
      %355 = vmatpush2.msra.mxu0 0.0
      %356 = vmatprep.subr.mxu0 0.0
      %357 = vmatpush2.msra.mxu0 0.0
      %358 = vmatprep.subr.mxu0 0.0
      %359 = vmatpush2.msra.mxu0 0.0
      %360 = vmatprep.subr.mxu0 0.0
      %361 = vmatpush2.msra.mxu0 0.0
      %362 = vmatprep.mubr.f32.mxu0 0.0
      %363 = vmatmul.mubr.f32.gmra.mxu0 %v218
      %v364 = vpop.f32.mrf.mxu0
      %v365 = vadd.f32 0.0, %v364
      %v366 = vpop.f32.mrf.mxu0
      %367 = vdwg.mxu0
      %v369 = vsel %vm216, %v201, 0
      %v371 = vsel %vm220, %v199, 0
      %v373 = vsel %vm220, %v206, 0
      %v375 = vsel %vm220, %v200, 0
      %377 = vmatprep.subr.mxu0 0.0
      %378 = vmatpush1.msra.mxu0 0.0
      %379 = vmatprep.subr.mxu0 0.0
      %380 = vmatpush1.msra.mxu0 0.0
      %381 = vmatprep.subr.mxu0 0.0
      %382 = vmatpush1.msra.mxu0 0.0
      %383 = vmatprep.subr.mxu0 0.0
      %384 = vmatpush1.msra.mxu0 0.0
      %385 = vmatprep.subr.mxu0 0.0
      %386 = vmatpush1.msra.mxu0 0.0
      %387 = vmatprep.subr.mxu0 0.0
      %388 = vmatpush1.msra.mxu0 0.0
      %389 = vmatprep.subr.mxu0 0.0
      %390 = vmatpush1.msra.mxu0 0.0
      %391 = vmatprep.subr.mxu0 0.0
      %392 = vmatpush1.msra.mxu0 0.0
      %393 = vmatprep.subr.mxu0 0.0
      %394 = vmatpush1.msra.mxu0 0.0
      %395 = vmatprep.subr.mxu0 0.0
      %396 = vmatpush1.msra.mxu0 0.0
      %397 = vmatprep.subr.mxu0 0.0
      %398 = vmatpush1.msra.mxu0 0.0
      %399 = vmatprep.subr.mxu0 0.0
      %400 = vmatpush1.msra.mxu0 0.0
      %401 = vmatprep.subr.mxu0 0.0
      %402 = vmatpush1.msra.mxu0 0.0
      %403 = vmatprep.subr.mxu0 0.0
      %404 = vmatpush1.msra.mxu0 0.0
      %405 = vmatprep.subr.mxu0 0.0
      %406 = vmatpush1.msra.mxu0 0.0
      %407 = vmatprep.subr.mxu0 %v373
      %408 = vmatpush1.msra.mxu0 %v371
      %409 = vmatprep.subr.mxu0 0.0
      %410 = vmatpush2.msra.mxu0 0.0
      %411 = vmatprep.subr.mxu0 0.0
      %412 = vmatpush2.msra.mxu0 0.0
      %413 = vmatprep.subr.mxu0 0.0
      %414 = vmatpush2.msra.mxu0 0.0
      %415 = vmatprep.subr.mxu0 0.0
      %416 = vmatpush2.msra.mxu0 0.0
      %417 = vmatprep.subr.mxu0 0.0
      %418 = vmatpush2.msra.mxu0 0.0
      %419 = vmatprep.subr.mxu0 0.0
      %420 = vmatpush2.msra.mxu0 0.0
      %421 = vmatprep.subr.mxu0 0.0
      %422 = vmatpush2.msra.mxu0 0.0
      %423 = vmatprep.subr.mxu0 0.0
      %424 = vmatpush2.msra.mxu0 0.0
      %425 = vmatprep.subr.mxu0 0.0
      %426 = vmatpush2.msra.mxu0 0.0
      %427 = vmatprep.subr.mxu0 0.0
      %428 = vmatpush2.msra.mxu0 0.0
      %429 = vmatprep.subr.mxu0 0.0
      %430 = vmatpush2.msra.mxu0 0.0
      %431 = vmatprep.subr.mxu0 0.0
      %432 = vmatpush2.msra.mxu0 0.0
      %433 = vmatprep.subr.mxu0 0.0
      %434 = vmatpush2.msra.mxu0 0.0
      %435 = vmatprep.subr.mxu0 0.0
      %436 = vmatpush2.msra.mxu0 0.0
      %437 = vmatprep.subr.mxu0 0.0
      %438 = vmatpush2.msra.mxu0 0.0
      %439 = vmatprep.subr.mxu0 0.0
      %440 = vmatpush2.msra.mxu0 0.0
      %441 = vmatprep.mubr.f32.mxu0 0.0
      %442 = vmatmul.mubr.f32.gmra.mxu0 %v369
      %v443 = vpop.f32.mrf.mxu0
      %v444 = vadd.f32 %v294, %v443
      %v445 = vpop.f32.mrf.mxu0
      %v446 = vadd.f32 %v296, %v445
      %447 = vdwg.mxu0
      %448 = vmatprep.subr.mxu0 0.0
      %449 = vmatpush1.msra.mxu0 0.0
      %450 = vmatprep.subr.mxu0 0.0
      %451 = vmatpush1.msra.mxu0 0.0
      %452 = vmatprep.subr.mxu0 0.0
      %453 = vmatpush1.msra.mxu0 0.0
      %454 = vmatprep.subr.mxu0 0.0
      %455 = vmatpush1.msra.mxu0 0.0
      %456 = vmatprep.subr.mxu0 0.0
      %457 = vmatpush1.msra.mxu0 0.0
      %458 = vmatprep.subr.mxu0 0.0
      %459 = vmatpush1.msra.mxu0 0.0
      %460 = vmatprep.subr.mxu0 0.0
      %461 = vmatpush1.msra.mxu0 0.0
      %462 = vmatprep.subr.mxu0 0.0
      %463 = vmatpush1.msra.mxu0 0.0
      %464 = vmatprep.subr.mxu0 0.0
      %465 = vmatpush1.msra.mxu0 0.0
      %466 = vmatprep.subr.mxu0 0.0
      %467 = vmatpush1.msra.mxu0 0.0
      %468 = vmatprep.subr.mxu0 0.0
      %469 = vmatpush1.msra.mxu0 0.0
      %470 = vmatprep.subr.mxu0 0.0
      %471 = vmatpush1.msra.mxu0 0.0
      %472 = vmatprep.subr.mxu0 0.0
      %473 = vmatpush1.msra.mxu0 0.0
      %474 = vmatprep.subr.mxu0 0.0
      %475 = vmatpush1.msra.mxu0 0.0
      %476 = vmatprep.subr.mxu0 0.0
      %477 = vmatpush1.msra.mxu0 0.0
      %478 = vmatprep.subr.mxu0 0.0
      %479 = vmatpush1.msra.mxu0 %v375
      %480 = vmatprep.subr.mxu0 0.0
      %481 = vmatpush2.msra.mxu0 0.0
      %482 = vmatprep.subr.mxu0 0.0
      %483 = vmatpush2.msra.mxu0 0.0
      %484 = vmatprep.subr.mxu0 0.0
      %485 = vmatpush2.msra.mxu0 0.0
      %486 = vmatprep.subr.mxu0 0.0
      %487 = vmatpush2.msra.mxu0 0.0
      %488 = vmatprep.subr.mxu0 0.0
      %489 = vmatpush2.msra.mxu0 0.0
      %490 = vmatprep.subr.mxu0 0.0
      %491 = vmatpush2.msra.mxu0 0.0
      %492 = vmatprep.subr.mxu0 0.0
      %493 = vmatpush2.msra.mxu0 0.0
      %494 = vmatprep.subr.mxu0 0.0
      %495 = vmatpush2.msra.mxu0 0.0
      %496 = vmatprep.subr.mxu0 0.0
      %497 = vmatpush2.msra.mxu0 0.0
      %498 = vmatprep.subr.mxu0 0.0
      %499 = vmatpush2.msra.mxu0 0.0
      %500 = vmatprep.subr.mxu0 0.0
      %501 = vmatpush2.msra.mxu0 0.0
      %502 = vmatprep.subr.mxu0 0.0
      %503 = vmatpush2.msra.mxu0 0.0
      %504 = vmatprep.subr.mxu0 0.0
      %505 = vmatpush2.msra.mxu0 0.0
      %506 = vmatprep.subr.mxu0 0.0
      %507 = vmatpush2.msra.mxu0 0.0
      %508 = vmatprep.subr.mxu0 0.0
      %509 = vmatpush2.msra.mxu0 0.0
      %510 = vmatprep.subr.mxu0 0.0
      %511 = vmatpush2.msra.mxu0 0.0
      %512 = vmatprep.mubr.f32.mxu0 0.0
      %513 = vmatmul.mubr.f32.gmra.mxu0 %v369
      %v514 = vpop.f32.mrf.mxu0
      %v515 = vadd.f32 %v365, %v514
      %v516 = vpop.f32.mrf.mxu0
      %517 = vdwg.mxu0
      %v518 = vld [vmem:[%s193] sm:$0xff]
      %v519 = vld [vmem:[%s193 + $0x8] sm:$0xf]
      %s520 = scalar_lea.vmem %s1, 16
      %v521 = vld [vmem:[%s520] sm:$0xff]
      %v524 = vcombine.high %v518, %v518
      %525 = vrot.lane.b32.xlu0 %v518, 126
      %v526 = vpop.permute.xlu0 %525
      %527 = vrot.lane.b32.xlu0 %v524, 126
      %v528 = vpop.permute.xlu0 %527
      %529 = vrot.lane.b32.xlu0 %v519, 126
      %v530 = vpop.permute.xlu0 %529
      %vm531 = vcmask 1031168
      %v532 = vsel %vm531, %v526, %v528
      %v533 = vsel %vm531, %v528, %v530
      %v535 = vsel %vm216, %v521, 0
      %v537 = vsel %vm220, %v532, 0
      %v539 = vsel %vm220, %v533, 0
      %v541 = vsel %vm220, %v530, 0
      %543 = vmatprep.subr.mxu0 0.0
      %544 = vmatpush1.msra.mxu0 0.0
      %545 = vmatprep.subr.mxu0 0.0
      %546 = vmatpush1.msra.mxu0 0.0
      %547 = vmatprep.subr.mxu0 0.0
      %548 = vmatpush1.msra.mxu0 0.0
      %549 = vmatprep.subr.mxu0 0.0
      %550 = vmatpush1.msra.mxu0 0.0
      %551 = vmatprep.subr.mxu0 0.0
      %552 = vmatpush1.msra.mxu0 0.0
      %553 = vmatprep.subr.mxu0 0.0
      %554 = vmatpush1.msra.mxu0 0.0
      %555 = vmatprep.subr.mxu0 0.0
      %556 = vmatpush1.msra.mxu0 0.0
      %557 = vmatprep.subr.mxu0 0.0
      %558 = vmatpush1.msra.mxu0 0.0
      %559 = vmatprep.subr.mxu0 0.0
      %560 = vmatpush1.msra.mxu0 0.0
      %561 = vmatprep.subr.mxu0 0.0
      %562 = vmatpush1.msra.mxu0 0.0
      %563 = vmatprep.subr.mxu0 0.0
      %564 = vmatpush1.msra.mxu0 0.0
      %565 = vmatprep.subr.mxu0 0.0
      %566 = vmatpush1.msra.mxu0 0.0
      %567 = vmatprep.subr.mxu0 0.0
      %568 = vmatpush1.msra.mxu0 0.0
      %569 = vmatprep.subr.mxu0 0.0
      %570 = vmatpush1.msra.mxu0 0.0
      %571 = vmatprep.subr.mxu0 0.0
      %572 = vmatpush1.msra.mxu0 0.0
      %573 = vmatprep.subr.mxu0 %v539
      %574 = vmatpush1.msra.mxu0 %v537
      %575 = vmatprep.subr.mxu0 0.0
      %576 = vmatpush2.msra.mxu0 0.0
      %577 = vmatprep.subr.mxu0 0.0
      %578 = vmatpush2.msra.mxu0 0.0
      %579 = vmatprep.subr.mxu0 0.0
      %580 = vmatpush2.msra.mxu0 0.0
      %581 = vmatprep.subr.mxu0 0.0
      %582 = vmatpush2.msra.mxu0 0.0
      %583 = vmatprep.subr.mxu0 0.0
      %584 = vmatpush2.msra.mxu0 0.0
      %585 = vmatprep.subr.mxu0 0.0
      %586 = vmatpush2.msra.mxu0 0.0
      %587 = vmatprep.subr.mxu0 0.0
      %588 = vmatpush2.msra.mxu0 0.0
      %589 = vmatprep.subr.mxu0 0.0
      %590 = vmatpush2.msra.mxu0 0.0
      %591 = vmatprep.subr.mxu0 0.0
      %592 = vmatpush2.msra.mxu0 0.0
      %593 = vmatprep.subr.mxu0 0.0
      %594 = vmatpush2.msra.mxu0 0.0
      %595 = vmatprep.subr.mxu0 0.0
      %596 = vmatpush2.msra.mxu0 0.0
      %597 = vmatprep.subr.mxu0 0.0
      %598 = vmatpush2.msra.mxu0 0.0
      %599 = vmatprep.subr.mxu0 0.0
      %600 = vmatpush2.msra.mxu0 0.0
      %601 = vmatprep.subr.mxu0 0.0
      %602 = vmatpush2.msra.mxu0 0.0
      %603 = vmatprep.subr.mxu0 0.0
      %604 = vmatpush2.msra.mxu0 0.0
      %605 = vmatprep.subr.mxu0 0.0
      %606 = vmatpush2.msra.mxu0 0.0
      %607 = vmatprep.mubr.f32.mxu0 0.0
      %608 = vmatmul.mubr.f32.gmra.mxu0 %v535
      %v609 = vpop.f32.mrf.mxu0
      %v610 = vadd.f32 0.0, %v609
      %v611 = vpop.f32.mrf.mxu0
      %v612 = vadd.f32 0.0, %v611
      %613 = vdwg.mxu0
      %614 = vmatprep.subr.mxu0 0.0
      %615 = vmatpush1.msra.mxu0 0.0
      %616 = vmatprep.subr.mxu0 0.0
      %617 = vmatpush1.msra.mxu0 0.0
      %618 = vmatprep.subr.mxu0 0.0
      %619 = vmatpush1.msra.mxu0 0.0
      %620 = vmatprep.subr.mxu0 0.0
      %621 = vmatpush1.msra.mxu0 0.0
      %622 = vmatprep.subr.mxu0 0.0
      %623 = vmatpush1.msra.mxu0 0.0
      %624 = vmatprep.subr.mxu0 0.0
      %625 = vmatpush1.msra.mxu0 0.0
      %626 = vmatprep.subr.mxu0 0.0
      %627 = vmatpush1.msra.mxu0 0.0
      %628 = vmatprep.subr.mxu0 0.0
      %629 = vmatpush1.msra.mxu0 0.0
      %630 = vmatprep.subr.mxu0 0.0
      %631 = vmatpush1.msra.mxu0 0.0
      %632 = vmatprep.subr.mxu0 0.0
      %633 = vmatpush1.msra.mxu0 0.0
      %634 = vmatprep.subr.mxu0 0.0
      %635 = vmatpush1.msra.mxu0 0.0
      %636 = vmatprep.subr.mxu0 0.0
      %637 = vmatpush1.msra.mxu0 0.0
      %638 = vmatprep.subr.mxu0 0.0
      %639 = vmatpush1.msra.mxu0 0.0
      %640 = vmatprep.subr.mxu0 0.0
      %641 = vmatpush1.msra.mxu0 0.0
      %642 = vmatprep.subr.mxu0 0.0
      %643 = vmatpush1.msra.mxu0 0.0
      %644 = vmatprep.subr.mxu0 0.0
      %645 = vmatpush1.msra.mxu0 %v541
      %646 = vmatprep.subr.mxu0 0.0
      %647 = vmatpush2.msra.mxu0 0.0
      %648 = vmatprep.subr.mxu0 0.0
      %649 = vmatpush2.msra.mxu0 0.0
      %650 = vmatprep.subr.mxu0 0.0
      %651 = vmatpush2.msra.mxu0 0.0
      %652 = vmatprep.subr.mxu0 0.0
      %653 = vmatpush2.msra.mxu0 0.0
      %654 = vmatprep.subr.mxu0 0.0
      %655 = vmatpush2.msra.mxu0 0.0
      %656 = vmatprep.subr.mxu0 0.0
      %657 = vmatpush2.msra.mxu0 0.0
      %658 = vmatprep.subr.mxu0 0.0
      %659 = vmatpush2.msra.mxu0 0.0
      %660 = vmatprep.subr.mxu0 0.0
      %661 = vmatpush2.msra.mxu0 0.0
      %662 = vmatprep.subr.mxu0 0.0
      %663 = vmatpush2.msra.mxu0 0.0
      %664 = vmatprep.subr.mxu0 0.0
      %665 = vmatpush2.msra.mxu0 0.0
      %666 = vmatprep.subr.mxu0 0.0
      %667 = vmatpush2.msra.mxu0 0.0
      %668 = vmatprep.subr.mxu0 0.0
      %669 = vmatpush2.msra.mxu0 0.0
      %670 = vmatprep.subr.mxu0 0.0
      %671 = vmatpush2.msra.mxu0 0.0
      %672 = vmatprep.subr.mxu0 0.0
      %673 = vmatpush2.msra.mxu0 0.0
      %674 = vmatprep.subr.mxu0 0.0
      %675 = vmatpush2.msra.mxu0 0.0
      %676 = vmatprep.subr.mxu0 0.0
      %677 = vmatpush2.msra.mxu0 0.0
      %678 = vmatprep.mubr.f32.mxu0 0.0
      %679 = vmatmul.mubr.f32.gmra.mxu0 %v535
      %v680 = vpop.f32.mrf.mxu0
      %v681 = vadd.f32 0.0, %v680
      %v682 = vpop.f32.mrf.mxu0
      %683 = vdwg.mxu0
      %v684 = vadd.f32 %v444, %v610
      %v685 = vadd.f32 %v446, %v612
      %v686 = vadd.f32 %v515, %v681
      %v687 = vld [vmem:[%s193] sm:$0xff]
      %v688 = vld [vmem:[%s193 + $0x8] sm:$0xf]
      %s689 = scalar_lea.vmem %s1, 24
      %v690 = vld [vmem:[%s689] sm:$0xff]
      %v693 = vcombine.high %v687, %v687
      %694 = vrot.lane.b32.xlu0 %v687, 110
      %v695 = vpop.permute.xlu0 %694
      %696 = vrot.lane.b32.xlu0 %v693, 110
      %v697 = vpop.permute.xlu0 %696
      %698 = vrot.lane.b32.xlu0 %v688, 110
      %v699 = vpop.permute.xlu0 %698
      %vm700 = vcmask 900096
      %v701 = vsel %vm700, %v695, %v697
      %v702 = vsel %vm700, %v697, %v699
      %v704 = vsel %vm216, %v690, 0
      %v706 = vsel %vm220, %v701, 0
      %v708 = vsel %vm220, %v702, 0
      %v710 = vsel %vm220, %v699, 0
      %712 = vmatprep.subr.mxu0 0.0
      %713 = vmatpush1.msra.mxu0 0.0
      %714 = vmatprep.subr.mxu0 0.0
      %715 = vmatpush1.msra.mxu0 0.0
      %716 = vmatprep.subr.mxu0 0.0
      %717 = vmatpush1.msra.mxu0 0.0
      %718 = vmatprep.subr.mxu0 0.0
      %719 = vmatpush1.msra.mxu0 0.0
      %720 = vmatprep.subr.mxu0 0.0
      %721 = vmatpush1.msra.mxu0 0.0
      %722 = vmatprep.subr.mxu0 0.0
      %723 = vmatpush1.msra.mxu0 0.0
      %724 = vmatprep.subr.mxu0 0.0
      %725 = vmatpush1.msra.mxu0 0.0
      %726 = vmatprep.subr.mxu0 0.0
      %727 = vmatpush1.msra.mxu0 0.0
      %728 = vmatprep.subr.mxu0 0.0
      %729 = vmatpush1.msra.mxu0 0.0
      %730 = vmatprep.subr.mxu0 0.0
      %731 = vmatpush1.msra.mxu0 0.0
      %732 = vmatprep.subr.mxu0 0.0
      %733 = vmatpush1.msra.mxu0 0.0
      %734 = vmatprep.subr.mxu0 0.0
      %735 = vmatpush1.msra.mxu0 0.0
      %736 = vmatprep.subr.mxu0 0.0
      %737 = vmatpush1.msra.mxu0 0.0
      %738 = vmatprep.subr.mxu0 0.0
      %739 = vmatpush1.msra.mxu0 0.0
      %740 = vmatprep.subr.mxu0 0.0
      %741 = vmatpush1.msra.mxu0 0.0
      %742 = vmatprep.subr.mxu0 %v708
      %743 = vmatpush1.msra.mxu0 %v706
      %744 = vmatprep.subr.mxu0 0.0
      %745 = vmatpush2.msra.mxu0 0.0
      %746 = vmatprep.subr.mxu0 0.0
      %747 = vmatpush2.msra.mxu0 0.0
      %748 = vmatprep.subr.mxu0 0.0
      %749 = vmatpush2.msra.mxu0 0.0
      %750 = vmatprep.subr.mxu0 0.0
      %751 = vmatpush2.msra.mxu0 0.0
      %752 = vmatprep.subr.mxu0 0.0
      %753 = vmatpush2.msra.mxu0 0.0
      %754 = vmatprep.subr.mxu0 0.0
      %755 = vmatpush2.msra.mxu0 0.0
      %756 = vmatprep.subr.mxu0 0.0
      %757 = vmatpush2.msra.mxu0 0.0
      %758 = vmatprep.subr.mxu0 0.0
      %759 = vmatpush2.msra.mxu0 0.0
      %760 = vmatprep.subr.mxu0 0.0
      %761 = vmatpush2.msra.mxu0 0.0
      %762 = vmatprep.subr.mxu0 0.0
      %763 = vmatpush2.msra.mxu0 0.0
      %764 = vmatprep.subr.mxu0 0.0
      %765 = vmatpush2.msra.mxu0 0.0
      %766 = vmatprep.subr.mxu0 0.0
      %767 = vmatpush2.msra.mxu0 0.0
      %768 = vmatprep.subr.mxu0 0.0
      %769 = vmatpush2.msra.mxu0 0.0
      %770 = vmatprep.subr.mxu0 0.0
      %771 = vmatpush2.msra.mxu0 0.0
      %772 = vmatprep.subr.mxu0 0.0
      %773 = vmatpush2.msra.mxu0 0.0
      %774 = vmatprep.subr.mxu0 0.0
      %775 = vmatpush2.msra.mxu0 0.0
      %776 = vmatprep.mubr.f32.mxu0 0.0
      %777 = vmatmul.mubr.f32.gmra.mxu0 %v704
      %v778 = vpop.f32.mrf.mxu0
      %v779 = vadd.f32 0.0, %v778
      %v780 = vpop.f32.mrf.mxu0
      %v781 = vadd.f32 0.0, %v780
      %782 = vdwg.mxu0
      %783 = vmatprep.subr.mxu0 0.0
      %784 = vmatpush1.msra.mxu0 0.0
      %785 = vmatprep.subr.mxu0 0.0
      %786 = vmatpush1.msra.mxu0 0.0
      %787 = vmatprep.subr.mxu0 0.0
      %788 = vmatpush1.msra.mxu0 0.0
      %789 = vmatprep.subr.mxu0 0.0
      %790 = vmatpush1.msra.mxu0 0.0
      %791 = vmatprep.subr.mxu0 0.0
      %792 = vmatpush1.msra.mxu0 0.0
      %793 = vmatprep.subr.mxu0 0.0
      %794 = vmatpush1.msra.mxu0 0.0
      %795 = vmatprep.subr.mxu0 0.0
      %796 = vmatpush1.msra.mxu0 0.0
      %797 = vmatprep.subr.mxu0 0.0
      %798 = vmatpush1.msra.mxu0 0.0
      %799 = vmatprep.subr.mxu0 0.0
      %800 = vmatpush1.msra.mxu0 0.0
      %801 = vmatprep.subr.mxu0 0.0
      %802 = vmatpush1.msra.mxu0 0.0
      %803 = vmatprep.subr.mxu0 0.0
      %804 = vmatpush1.msra.mxu0 0.0
      %805 = vmatprep.subr.mxu0 0.0
      %806 = vmatpush1.msra.mxu0 0.0
      %807 = vmatprep.subr.mxu0 0.0
      %808 = vmatpush1.msra.mxu0 0.0
      %809 = vmatprep.subr.mxu0 0.0
      %810 = vmatpush1.msra.mxu0 0.0
      %811 = vmatprep.subr.mxu0 0.0
      %812 = vmatpush1.msra.mxu0 0.0
      %813 = vmatprep.subr.mxu0 0.0
      %814 = vmatpush1.msra.mxu0 %v710
      %815 = vmatprep.subr.mxu0 0.0
      %816 = vmatpush2.msra.mxu0 0.0
      %817 = vmatprep.subr.mxu0 0.0
      %818 = vmatpush2.msra.mxu0 0.0
      %819 = vmatprep.subr.mxu0 0.0
      %820 = vmatpush2.msra.mxu0 0.0
      %821 = vmatprep.subr.mxu0 0.0
      %822 = vmatpush2.msra.mxu0 0.0
      %823 = vmatprep.subr.mxu0 0.0
      %824 = vmatpush2.msra.mxu0 0.0
      %825 = vmatprep.subr.mxu0 0.0
      %826 = vmatpush2.msra.mxu0 0.0
      %827 = vmatprep.subr.mxu0 0.0
      %828 = vmatpush2.msra.mxu0 0.0
      %829 = vmatprep.subr.mxu0 0.0
      %830 = vmatpush2.msra.mxu0 0.0
      %831 = vmatprep.subr.mxu0 0.0
      %832 = vmatpush2.msra.mxu0 0.0
      %833 = vmatprep.subr.mxu0 0.0
      %834 = vmatpush2.msra.mxu0 0.0
      %835 = vmatprep.subr.mxu0 0.0
      %836 = vmatpush2.msra.mxu0 0.0
      %837 = vmatprep.subr.mxu0 0.0
      %838 = vmatpush2.msra.mxu0 0.0
      %839 = vmatprep.subr.mxu0 0.0
      %840 = vmatpush2.msra.mxu0 0.0
      %841 = vmatprep.subr.mxu0 0.0
      %842 = vmatpush2.msra.mxu0 0.0
      %843 = vmatprep.subr.mxu0 0.0
      %844 = vmatpush2.msra.mxu0 0.0
      %845 = vmatprep.subr.mxu0 0.0
      %846 = vmatpush2.msra.mxu0 0.0
      %847 = vmatprep.mubr.f32.mxu0 0.0
      %848 = vmatmul.mubr.f32.gmra.mxu0 %v704
      %v849 = vpop.f32.mrf.mxu0
      %v850 = vadd.f32 0.0, %v849
      %v851 = vpop.f32.mrf.mxu0
      %852 = vdwg.mxu0
      %v853 = vadd.f32 %v684, %v779
      %v854 = vadd.f32 %v685, %v781
      %v855 = vadd.f32 %v686, %v850
      %v856 = vld [vmem:[%s193] sm:$0xff]
      %v857 = vld [vmem:[%s193 + $0x8] sm:$0xf]
      %s858 = scalar_lea.vmem %s1, 32
      %v859 = vld [vmem:[%s858] sm:$0xff]
      %v862 = vcombine.high %v856, %v856
      %863 = vrot.lane.b32.xlu0 %v856, 109
      %v864 = vpop.permute.xlu0 %863
      %865 = vrot.lane.b32.xlu0 %v862, 109
      %v866 = vpop.permute.xlu0 %865
      %867 = vrot.lane.b32.xlu0 %v857, 109
      %v868 = vpop.permute.xlu0 %867
      %vm869 = vcmask 891904
      %v870 = vsel %vm869, %v864, %v866
      %v871 = vsel %vm869, %v866, %v868
      %v873 = vsel %vm216, %v859, 0
      %v875 = vsel %vm220, %v870, 0
      %v877 = vsel %vm220, %v871, 0
      %v879 = vsel %vm220, %v868, 0
      %881 = vmatprep.subr.mxu0 0.0
      %882 = vmatpush1.msra.mxu0 0.0
      %883 = vmatprep.subr.mxu0 0.0
      %884 = vmatpush1.msra.mxu0 0.0
      %885 = vmatprep.subr.mxu0 0.0
      %886 = vmatpush1.msra.mxu0 0.0
      %887 = vmatprep.subr.mxu0 0.0
      %888 = vmatpush1.msra.mxu0 0.0
      %889 = vmatprep.subr.mxu0 0.0
      %890 = vmatpush1.msra.mxu0 0.0
      %891 = vmatprep.subr.mxu0 0.0
      %892 = vmatpush1.msra.mxu0 0.0
      %893 = vmatprep.subr.mxu0 0.0
      %894 = vmatpush1.msra.mxu0 0.0
      %895 = vmatprep.subr.mxu0 0.0
      %896 = vmatpush1.msra.mxu0 0.0
      %897 = vmatprep.subr.mxu0 0.0
      %898 = vmatpush1.msra.mxu0 0.0
      %899 = vmatprep.subr.mxu0 0.0
      %900 = vmatpush1.msra.mxu0 0.0
      %901 = vmatprep.subr.mxu0 0.0
      %902 = vmatpush1.msra.mxu0 0.0
      %903 = vmatprep.subr.mxu0 0.0
      %904 = vmatpush1.msra.mxu0 0.0
      %905 = vmatprep.subr.mxu0 0.0
      %906 = vmatpush1.msra.mxu0 0.0
      %907 = vmatprep.subr.mxu0 0.0
      %908 = vmatpush1.msra.mxu0 0.0
      %909 = vmatprep.subr.mxu0 0.0
      %910 = vmatpush1.msra.mxu0 0.0
      %911 = vmatprep.subr.mxu0 %v877
      %912 = vmatpush1.msra.mxu0 %v875
      %913 = vmatprep.subr.mxu0 0.0
      %914 = vmatpush2.msra.mxu0 0.0
      %915 = vmatprep.subr.mxu0 0.0
      %916 = vmatpush2.msra.mxu0 0.0
      %917 = vmatprep.subr.mxu0 0.0
      %918 = vmatpush2.msra.mxu0 0.0
      %919 = vmatprep.subr.mxu0 0.0
      %920 = vmatpush2.msra.mxu0 0.0
      %921 = vmatprep.subr.mxu0 0.0
      %922 = vmatpush2.msra.mxu0 0.0
      %923 = vmatprep.subr.mxu0 0.0
      %924 = vmatpush2.msra.mxu0 0.0
      %925 = vmatprep.subr.mxu0 0.0
      %926 = vmatpush2.msra.mxu0 0.0
      %927 = vmatprep.subr.mxu0 0.0
      %928 = vmatpush2.msra.mxu0 0.0
      %929 = vmatprep.subr.mxu0 0.0
      %930 = vmatpush2.msra.mxu0 0.0
      %931 = vmatprep.subr.mxu0 0.0
      %932 = vmatpush2.msra.mxu0 0.0
      %933 = vmatprep.subr.mxu0 0.0
      %934 = vmatpush2.msra.mxu0 0.0
      %935 = vmatprep.subr.mxu0 0.0
      %936 = vmatpush2.msra.mxu0 0.0
      %937 = vmatprep.subr.mxu0 0.0
      %938 = vmatpush2.msra.mxu0 0.0
      %939 = vmatprep.subr.mxu0 0.0
      %940 = vmatpush2.msra.mxu0 0.0
      %941 = vmatprep.subr.mxu0 0.0
      %942 = vmatpush2.msra.mxu0 0.0
      %943 = vmatprep.subr.mxu0 0.0
      %944 = vmatpush2.msra.mxu0 0.0
      %945 = vmatprep.mubr.f32.mxu0 0.0
      %946 = vmatmul.mubr.f32.gmra.mxu0 %v873
      %v947 = vpop.f32.mrf.mxu0
      %v948 = vadd.f32 0.0, %v947
      %v949 = vpop.f32.mrf.mxu0
      %v950 = vadd.f32 0.0, %v949
      %951 = vdwg.mxu0
      %952 = vmatprep.subr.mxu0 0.0
      %953 = vmatpush1.msra.mxu0 0.0
      %954 = vmatprep.subr.mxu0 0.0
      %955 = vmatpush1.msra.mxu0 0.0
      %956 = vmatprep.subr.mxu0 0.0
      %957 = vmatpush1.msra.mxu0 0.0
      %958 = vmatprep.subr.mxu0 0.0
      %959 = vmatpush1.msra.mxu0 0.0
      %960 = vmatprep.subr.mxu0 0.0
      %961 = vmatpush1.msra.mxu0 0.0
      %962 = vmatprep.subr.mxu0 0.0
      %963 = vmatpush1.msra.mxu0 0.0
      %964 = vmatprep.subr.mxu0 0.0
      %965 = vmatpush1.msra.mxu0 0.0
      %966 = vmatprep.subr.mxu0 0.0
      %967 = vmatpush1.msra.mxu0 0.0
      %968 = vmatprep.subr.mxu0 0.0
      %969 = vmatpush1.msra.mxu0 0.0
      %970 = vmatprep.subr.mxu0 0.0
      %971 = vmatpush1.msra.mxu0 0.0
      %972 = vmatprep.subr.mxu0 0.0
      %973 = vmatpush1.msra.mxu0 0.0
      %974 = vmatprep.subr.mxu0 0.0
      %975 = vmatpush1.msra.mxu0 0.0
      %976 = vmatprep.subr.mxu0 0.0
      %977 = vmatpush1.msra.mxu0 0.0
      %978 = vmatprep.subr.mxu0 0.0
      %979 = vmatpush1.msra.mxu0 0.0
      %980 = vmatprep.subr.mxu0 0.0
      %981 = vmatpush1.msra.mxu0 0.0
      %982 = vmatprep.subr.mxu0 0.0
      %983 = vmatpush1.msra.mxu0 %v879
      %984 = vmatprep.subr.mxu0 0.0
      %985 = vmatpush2.msra.mxu0 0.0
      %986 = vmatprep.subr.mxu0 0.0
      %987 = vmatpush2.msra.mxu0 0.0
      %988 = vmatprep.subr.mxu0 0.0
      %989 = vmatpush2.msra.mxu0 0.0
      %990 = vmatprep.subr.mxu0 0.0
      %991 = vmatpush2.msra.mxu0 0.0
      %992 = vmatprep.subr.mxu0 0.0
      %993 = vmatpush2.msra.mxu0 0.0
      %994 = vmatprep.subr.mxu0 0.0
      %995 = vmatpush2.msra.mxu0 0.0
      %996 = vmatprep.subr.mxu0 0.0
      %997 = vmatpush2.msra.mxu0 0.0
      %998 = vmatprep.subr.mxu0 0.0
      %999 = vmatpush2.msra.mxu0 0.0
      %1000 = vmatprep.subr.mxu0 0.0
      %1001 = vmatpush2.msra.mxu0 0.0
      %1002 = vmatprep.subr.mxu0 0.0
      %1003 = vmatpush2.msra.mxu0 0.0
      %1004 = vmatprep.subr.mxu0 0.0
      %1005 = vmatpush2.msra.mxu0 0.0
      %1006 = vmatprep.subr.mxu0 0.0
      %1007 = vmatpush2.msra.mxu0 0.0
      %1008 = vmatprep.subr.mxu0 0.0
      %1009 = vmatpush2.msra.mxu0 0.0
      %1010 = vmatprep.subr.mxu0 0.0
      %1011 = vmatpush2.msra.mxu0 0.0
      %1012 = vmatprep.subr.mxu0 0.0
      %1013 = vmatpush2.msra.mxu0 0.0
      %1014 = vmatprep.subr.mxu0 0.0
      %1015 = vmatpush2.msra.mxu0 0.0
      %1016 = vmatprep.mubr.f32.mxu0 0.0
      %1017 = vmatmul.mubr.f32.gmra.mxu0 %v873
      %v1018 = vpop.f32.mrf.mxu0
      %v1019 = vadd.f32 0.0, %v1018
      %v1020 = vpop.f32.mrf.mxu0
      %1021 = vdwg.mxu0
      %v1022 = vadd.f32 %v853, %v948
      %v1023 = vadd.f32 %v854, %v950
      %v1024 = vadd.f32 %v855, %v1019
      %v1025 = vld [vmem:[%s193] sm:$0xff]
      %v1026 = vld [vmem:[%s193 + $0x8] sm:$0xf]
      %s1027 = scalar_lea.vmem %s1, 40
      %v1028 = vld [vmem:[%s1027] sm:$0xff]
      %v1031 = vcombine.high %v1025, %v1025
      %1032 = vrot.lane.b32.xlu0 %v1025, 108
      %v1033 = vpop.permute.xlu0 %1032
      %1034 = vrot.lane.b32.xlu0 %v1031, 108
      %v1035 = vpop.permute.xlu0 %1034
      %1036 = vrot.lane.b32.xlu0 %v1026, 108
      %v1037 = vpop.permute.xlu0 %1036
      %vm1038 = vcmask 883712
      %v1039 = vsel %vm1038, %v1033, %v1035
      %v1040 = vsel %vm1038, %v1035, %v1037
      %v1042 = vsel %vm216, %v1028, 0
      %v1044 = vsel %vm220, %v1039, 0
      %v1046 = vsel %vm220, %v1040, 0
      %v1048 = vsel %vm220, %v1037, 0
      %1050 = vmatprep.subr.mxu0 0.0
      %1051 = vmatpush1.msra.mxu0 0.0
      %1052 = vmatprep.subr.mxu0 0.0
      %1053 = vmatpush1.msra.mxu0 0.0
      %1054 = vmatprep.subr.mxu0 0.0
      %1055 = vmatpush1.msra.mxu0 0.0
      %1056 = vmatprep.subr.mxu0 0.0
      %1057 = vmatpush1.msra.mxu0 0.0
      %1058 = vmatprep.subr.mxu0 0.0
      %1059 = vmatpush1.msra.mxu0 0.0
      %1060 = vmatprep.subr.mxu0 0.0
      %1061 = vmatpush1.msra.mxu0 0.0
      %1062 = vmatprep.subr.mxu0 0.0
      %1063 = vmatpush1.msra.mxu0 0.0
      %1064 = vmatprep.subr.mxu0 0.0
      %1065 = vmatpush1.msra.mxu0 0.0
      %1066 = vmatprep.subr.mxu0 0.0
      %1067 = vmatpush1.msra.mxu0 0.0
      %1068 = vmatprep.subr.mxu0 0.0
      %1069 = vmatpush1.msra.mxu0 0.0
      %1070 = vmatprep.subr.mxu0 0.0
      %1071 = vmatpush1.msra.mxu0 0.0
      %1072 = vmatprep.subr.mxu0 0.0
      %1073 = vmatpush1.msra.mxu0 0.0
      %1074 = vmatprep.subr.mxu0 0.0
      %1075 = vmatpush1.msra.mxu0 0.0
      %1076 = vmatprep.subr.mxu0 0.0
      %1077 = vmatpush1.msra.mxu0 0.0
      %1078 = vmatprep.subr.mxu0 0.0
      %1079 = vmatpush1.msra.mxu0 0.0
      %1080 = vmatprep.subr.mxu0 %v1046
      %1081 = vmatpush1.msra.mxu0 %v1044
      %1082 = vmatprep.subr.mxu0 0.0
      %1083 = vmatpush2.msra.mxu0 0.0
      %1084 = vmatprep.subr.mxu0 0.0
      %1085 = vmatpush2.msra.mxu0 0.0
      %1086 = vmatprep.subr.mxu0 0.0
      %1087 = vmatpush2.msra.mxu0 0.0
      %1088 = vmatprep.subr.mxu0 0.0
      %1089 = vmatpush2.msra.mxu0 0.0
      %1090 = vmatprep.subr.mxu0 0.0
      %1091 = vmatpush2.msra.mxu0 0.0
      %1092 = vmatprep.subr.mxu0 0.0
      %1093 = vmatpush2.msra.mxu0 0.0
      %1094 = vmatprep.subr.mxu0 0.0
      %1095 = vmatpush2.msra.mxu0 0.0
      %1096 = vmatprep.subr.mxu0 0.0
      %1097 = vmatpush2.msra.mxu0 0.0
      %1098 = vmatprep.subr.mxu0 0.0
      %1099 = vmatpush2.msra.mxu0 0.0
      %1100 = vmatprep.subr.mxu0 0.0
      %1101 = vmatpush2.msra.mxu0 0.0
      %1102 = vmatprep.subr.mxu0 0.0
      %1103 = vmatpush2.msra.mxu0 0.0
      %1104 = vmatprep.subr.mxu0 0.0
      %1105 = vmatpush2.msra.mxu0 0.0
      %1106 = vmatprep.subr.mxu0 0.0
      %1107 = vmatpush2.msra.mxu0 0.0
      %1108 = vmatprep.subr.mxu0 0.0
      %1109 = vmatpush2.msra.mxu0 0.0
      %1110 = vmatprep.subr.mxu0 0.0
      %1111 = vmatpush2.msra.mxu0 0.0
      %1112 = vmatprep.subr.mxu0 0.0
      %1113 = vmatpush2.msra.mxu0 0.0
      %1114 = vmatprep.mubr.f32.mxu0 0.0
      %1115 = vmatmul.mubr.f32.gmra.mxu0 %v1042
      %v1116 = vpop.f32.mrf.mxu0
      %v1117 = vadd.f32 0.0, %v1116
      %v1118 = vpop.f32.mrf.mxu0
      %v1119 = vadd.f32 0.0, %v1118
      %1120 = vdwg.mxu0
      %1121 = vmatprep.subr.mxu0 0.0
      %1122 = vmatpush1.msra.mxu0 0.0
      %1123 = vmatprep.subr.mxu0 0.0
      %1124 = vmatpush1.msra.mxu0 0.0
      %1125 = vmatprep.subr.mxu0 0.0
      %1126 = vmatpush1.msra.mxu0 0.0
      %1127 = vmatprep.subr.mxu0 0.0
      %1128 = vmatpush1.msra.mxu0 0.0
      %1129 = vmatprep.subr.mxu0 0.0
      %1130 = vmatpush1.msra.mxu0 0.0
      %1131 = vmatprep.subr.mxu0 0.0
      %1132 = vmatpush1.msra.mxu0 0.0
      %1133 = vmatprep.subr.mxu0 0.0
      %1134 = vmatpush1.msra.mxu0 0.0
      %1135 = vmatprep.subr.mxu0 0.0
      %1136 = vmatpush1.msra.mxu0 0.0
      %1137 = vmatprep.subr.mxu0 0.0
      %1138 = vmatpush1.msra.mxu0 0.0
      %1139 = vmatprep.subr.mxu0 0.0
      %1140 = vmatpush1.msra.mxu0 0.0
      %1141 = vmatprep.subr.mxu0 0.0
      %1142 = vmatpush1.msra.mxu0 0.0
      %1143 = vmatprep.subr.mxu0 0.0
      %1144 = vmatpush1.msra.mxu0 0.0
      %1145 = vmatprep.subr.mxu0 0.0
      %1146 = vmatpush1.msra.mxu0 0.0
      %1147 = vmatprep.subr.mxu0 0.0
      %1148 = vmatpush1.msra.mxu0 0.0
      %1149 = vmatprep.subr.mxu0 0.0
      %1150 = vmatpush1.msra.mxu0 0.0
      %1151 = vmatprep.subr.mxu0 0.0
      %1152 = vmatpush1.msra.mxu0 %v1048
      %1153 = vmatprep.subr.mxu0 0.0
      %1154 = vmatpush2.msra.mxu0 0.0
      %1155 = vmatprep.subr.mxu0 0.0
      %1156 = vmatpush2.msra.mxu0 0.0
      %1157 = vmatprep.subr.mxu0 0.0
      %1158 = vmatpush2.msra.mxu0 0.0
      %1159 = vmatprep.subr.mxu0 0.0
      %1160 = vmatpush2.msra.mxu0 0.0
      %1161 = vmatprep.subr.mxu0 0.0
      %1162 = vmatpush2.msra.mxu0 0.0
      %1163 = vmatprep.subr.mxu0 0.0
      %1164 = vmatpush2.msra.mxu0 0.0
      %1165 = vmatprep.subr.mxu0 0.0
      %1166 = vmatpush2.msra.mxu0 0.0
      %1167 = vmatprep.subr.mxu0 0.0
      %1168 = vmatpush2.msra.mxu0 0.0
      %1169 = vmatprep.subr.mxu0 0.0
      %1170 = vmatpush2.msra.mxu0 0.0
      %1171 = vmatprep.subr.mxu0 0.0
      %1172 = vmatpush2.msra.mxu0 0.0
      %1173 = vmatprep.subr.mxu0 0.0
      %1174 = vmatpush2.msra.mxu0 0.0
      %1175 = vmatprep.subr.mxu0 0.0
      %1176 = vmatpush2.msra.mxu0 0.0
      %1177 = vmatprep.subr.mxu0 0.0
      %1178 = vmatpush2.msra.mxu0 0.0
      %1179 = vmatprep.subr.mxu0 0.0
      %1180 = vmatpush2.msra.mxu0 0.0
      %1181 = vmatprep.subr.mxu0 0.0
      %1182 = vmatpush2.msra.mxu0 0.0
      %1183 = vmatprep.subr.mxu0 0.0
      %1184 = vmatpush2.msra.mxu0 0.0
      %1185 = vmatprep.mubr.f32.mxu0 0.0
      %1186 = vmatmul.mubr.f32.gmra.mxu0 %v1042
      %v1187 = vpop.f32.mrf.mxu0
      %v1188 = vadd.f32 0.0, %v1187
      %v1189 = vpop.f32.mrf.mxu0
      %1190 = vdwg.mxu0
      %v1191 = vadd.f32 %v1022, %v1117
      %v1192 = vadd.f32 %v1023, %v1119
      %v1193 = vadd.f32 %v1024, %v1188
      %v1194 = vld [vmem:[%s193] sm:$0xff]
      %v1195 = vld [vmem:[%s193 + $0x8] sm:$0xf]
      %s1196 = scalar_lea.vmem %s1, 48
      %v1197 = vld [vmem:[%s1196] sm:$0xff]
      %v1200 = vcombine.high %v1194, %v1194
      %1201 = vrot.lane.b32.xlu0 %v1194, 92
      %v1202 = vpop.permute.xlu0 %1201
      %1203 = vrot.lane.b32.xlu0 %v1200, 92
      %v1204 = vpop.permute.xlu0 %1203
      %1205 = vrot.lane.b32.xlu0 %v1195, 92
      %v1206 = vpop.permute.xlu0 %1205
      %vm1207 = vcmask 752640
      %v1208 = vsel %vm1207, %v1202, %v1204
      %v1209 = vsel %vm1207, %v1204, %v1206
      %v1211 = vsel %vm216, %v1197, 0
      %v1213 = vsel %vm220, %v1208, 0
      %v1215 = vsel %vm220, %v1209, 0
      %v1217 = vsel %vm220, %v1206, 0
      %1219 = vmatprep.subr.mxu0 0.0
      %1220 = vmatpush1.msra.mxu0 0.0
      %1221 = vmatprep.subr.mxu0 0.0
      %1222 = vmatpush1.msra.mxu0 0.0
      %1223 = vmatprep.subr.mxu0 0.0
      %1224 = vmatpush1.msra.mxu0 0.0
      %1225 = vmatprep.subr.mxu0 0.0
      %1226 = vmatpush1.msra.mxu0 0.0
      %1227 = vmatprep.subr.mxu0 0.0
      %1228 = vmatpush1.msra.mxu0 0.0
      %1229 = vmatprep.subr.mxu0 0.0
      %1230 = vmatpush1.msra.mxu0 0.0
      %1231 = vmatprep.subr.mxu0 0.0
      %1232 = vmatpush1.msra.mxu0 0.0
      %1233 = vmatprep.subr.mxu0 0.0
      %1234 = vmatpush1.msra.mxu0 0.0
      %1235 = vmatprep.subr.mxu0 0.0
      %1236 = vmatpush1.msra.mxu0 0.0
      %1237 = vmatprep.subr.mxu0 0.0
      %1238 = vmatpush1.msra.mxu0 0.0
      %1239 = vmatprep.subr.mxu0 0.0
      %1240 = vmatpush1.msra.mxu0 0.0
      %1241 = vmatprep.subr.mxu0 0.0
      %1242 = vmatpush1.msra.mxu0 0.0
      %1243 = vmatprep.subr.mxu0 0.0
      %1244 = vmatpush1.msra.mxu0 0.0
      %1245 = vmatprep.subr.mxu0 0.0
      %1246 = vmatpush1.msra.mxu0 0.0
      %1247 = vmatprep.subr.mxu0 0.0
      %1248 = vmatpush1.msra.mxu0 0.0
      %1249 = vmatprep.subr.mxu0 %v1215
      %1250 = vmatpush1.msra.mxu0 %v1213
      %1251 = vmatprep.subr.mxu0 0.0
      %1252 = vmatpush2.msra.mxu0 0.0
      %1253 = vmatprep.subr.mxu0 0.0
      %1254 = vmatpush2.msra.mxu0 0.0
      %1255 = vmatprep.subr.mxu0 0.0
      %1256 = vmatpush2.msra.mxu0 0.0
      %1257 = vmatprep.subr.mxu0 0.0
      %1258 = vmatpush2.msra.mxu0 0.0
      %1259 = vmatprep.subr.mxu0 0.0
      %1260 = vmatpush2.msra.mxu0 0.0
      %1261 = vmatprep.subr.mxu0 0.0
      %1262 = vmatpush2.msra.mxu0 0.0
      %1263 = vmatprep.subr.mxu0 0.0
      %1264 = vmatpush2.msra.mxu0 0.0
      %1265 = vmatprep.subr.mxu0 0.0
      %1266 = vmatpush2.msra.mxu0 0.0
      %1267 = vmatprep.subr.mxu0 0.0
      %1268 = vmatpush2.msra.mxu0 0.0
      %1269 = vmatprep.subr.mxu0 0.0
      %1270 = vmatpush2.msra.mxu0 0.0
      %1271 = vmatprep.subr.mxu0 0.0
      %1272 = vmatpush2.msra.mxu0 0.0
      %1273 = vmatprep.subr.mxu0 0.0
      %1274 = vmatpush2.msra.mxu0 0.0
      %1275 = vmatprep.subr.mxu0 0.0
      %1276 = vmatpush2.msra.mxu0 0.0
      %1277 = vmatprep.subr.mxu0 0.0
      %1278 = vmatpush2.msra.mxu0 0.0
      %1279 = vmatprep.subr.mxu0 0.0
      %1280 = vmatpush2.msra.mxu0 0.0
      %1281 = vmatprep.subr.mxu0 0.0
      %1282 = vmatpush2.msra.mxu0 0.0
      %1283 = vmatprep.mubr.f32.mxu0 0.0
      %1284 = vmatmul.mubr.f32.gmra.mxu0 %v1211
      %v1285 = vpop.f32.mrf.mxu0
      %v1286 = vadd.f32 0.0, %v1285
      %v1287 = vpop.f32.mrf.mxu0
      %v1288 = vadd.f32 0.0, %v1287
      %1289 = vdwg.mxu0
      %1290 = vmatprep.subr.mxu0 0.0
      %1291 = vmatpush1.msra.mxu0 0.0
      %1292 = vmatprep.subr.mxu0 0.0
      %1293 = vmatpush1.msra.mxu0 0.0
      %1294 = vmatprep.subr.mxu0 0.0
      %1295 = vmatpush1.msra.mxu0 0.0
      %1296 = vmatprep.subr.mxu0 0.0
      %1297 = vmatpush1.msra.mxu0 0.0
      %1298 = vmatprep.subr.mxu0 0.0
      %1299 = vmatpush1.msra.mxu0 0.0
      %1300 = vmatprep.subr.mxu0 0.0
      %1301 = vmatpush1.msra.mxu0 0.0
      %1302 = vmatprep.subr.mxu0 0.0
      %1303 = vmatpush1.msra.mxu0 0.0
      %1304 = vmatprep.subr.mxu0 0.0
      %1305 = vmatpush1.msra.mxu0 0.0
      %1306 = vmatprep.subr.mxu0 0.0
      %1307 = vmatpush1.msra.mxu0 0.0
      %1308 = vmatprep.subr.mxu0 0.0
      %1309 = vmatpush1.msra.mxu0 0.0
      %1310 = vmatprep.subr.mxu0 0.0
      %1311 = vmatpush1.msra.mxu0 0.0
      %1312 = vmatprep.subr.mxu0 0.0
      %1313 = vmatpush1.msra.mxu0 0.0
      %1314 = vmatprep.subr.mxu0 0.0
      %1315 = vmatpush1.msra.mxu0 0.0
      %1316 = vmatprep.subr.mxu0 0.0
      %1317 = vmatpush1.msra.mxu0 0.0
      %1318 = vmatprep.subr.mxu0 0.0
      %1319 = vmatpush1.msra.mxu0 0.0
      %1320 = vmatprep.subr.mxu0 0.0
      %1321 = vmatpush1.msra.mxu0 %v1217
      %1322 = vmatprep.subr.mxu0 0.0
      %1323 = vmatpush2.msra.mxu0 0.0
      %1324 = vmatprep.subr.mxu0 0.0
      %1325 = vmatpush2.msra.mxu0 0.0
      %1326 = vmatprep.subr.mxu0 0.0
      %1327 = vmatpush2.msra.mxu0 0.0
      %1328 = vmatprep.subr.mxu0 0.0
      %1329 = vmatpush2.msra.mxu0 0.0
      %1330 = vmatprep.subr.mxu0 0.0
      %1331 = vmatpush2.msra.mxu0 0.0
      %1332 = vmatprep.subr.mxu0 0.0
      %1333 = vmatpush2.msra.mxu0 0.0
      %1334 = vmatprep.subr.mxu0 0.0
      %1335 = vmatpush2.msra.mxu0 0.0
      %1336 = vmatprep.subr.mxu0 0.0
      %1337 = vmatpush2.msra.mxu0 0.0
      %1338 = vmatprep.subr.mxu0 0.0
      %1339 = vmatpush2.msra.mxu0 0.0
      %1340 = vmatprep.subr.mxu0 0.0
      %1341 = vmatpush2.msra.mxu0 0.0
      %1342 = vmatprep.subr.mxu0 0.0
      %1343 = vmatpush2.msra.mxu0 0.0
      %1344 = vmatprep.subr.mxu0 0.0
      %1345 = vmatpush2.msra.mxu0 0.0
      %1346 = vmatprep.subr.mxu0 0.0
      %1347 = vmatpush2.msra.mxu0 0.0
      %1348 = vmatprep.subr.mxu0 0.0
      %1349 = vmatpush2.msra.mxu0 0.0
      %1350 = vmatprep.subr.mxu0 0.0
      %1351 = vmatpush2.msra.mxu0 0.0
      %1352 = vmatprep.subr.mxu0 0.0
      %1353 = vmatpush2.msra.mxu0 0.0
      %1354 = vmatprep.mubr.f32.mxu0 0.0
      %1355 = vmatmul.mubr.f32.gmra.mxu0 %v1211
      %v1356 = vpop.f32.mrf.mxu0
      %v1357 = vadd.f32 0.0, %v1356
      %v1358 = vpop.f32.mrf.mxu0
      %1359 = vdwg.mxu0
      %v1360 = vadd.f32 %v1191, %v1286
      %v1361 = vadd.f32 %v1192, %v1288
      %v1362 = vadd.f32 %v1193, %v1357
      %v1363 = vld [vmem:[%s193] sm:$0xff]
      %v1364 = vld [vmem:[%s193 + $0x8] sm:$0xf]
      %s1365 = scalar_lea.vmem %s1, 56
      %v1366 = vld [vmem:[%s1365] sm:$0xff]
      %v1369 = vcombine.high %v1363, %v1363
      %1370 = vrot.lane.b32.xlu0 %v1363, 91
      %v1371 = vpop.permute.xlu0 %1370
      %1372 = vrot.lane.b32.xlu0 %v1369, 91
      %v1373 = vpop.permute.xlu0 %1372
      %1374 = vrot.lane.b32.xlu0 %v1364, 91
      %v1375 = vpop.permute.xlu0 %1374
      %vm1376 = vcmask 744448
      %v1377 = vsel %vm1376, %v1371, %v1373
      %v1378 = vsel %vm1376, %v1373, %v1375
      %v1380 = vsel %vm216, %v1366, 0
      %v1382 = vsel %vm220, %v1377, 0
      %v1384 = vsel %vm220, %v1378, 0
      %v1386 = vsel %vm220, %v1375, 0
      %1388 = vmatprep.subr.mxu0 0.0
      %1389 = vmatpush1.msra.mxu0 0.0
      %1390 = vmatprep.subr.mxu0 0.0
      %1391 = vmatpush1.msra.mxu0 0.0
      %1392 = vmatprep.subr.mxu0 0.0
      %1393 = vmatpush1.msra.mxu0 0.0
      %1394 = vmatprep.subr.mxu0 0.0
      %1395 = vmatpush1.msra.mxu0 0.0
      %1396 = vmatprep.subr.mxu0 0.0
      %1397 = vmatpush1.msra.mxu0 0.0
      %1398 = vmatprep.subr.mxu0 0.0
      %1399 = vmatpush1.msra.mxu0 0.0
      %1400 = vmatprep.subr.mxu0 0.0
      %1401 = vmatpush1.msra.mxu0 0.0
      %1402 = vmatprep.subr.mxu0 0.0
      %1403 = vmatpush1.msra.mxu0 0.0
      %1404 = vmatprep.subr.mxu0 0.0
      %1405 = vmatpush1.msra.mxu0 0.0
      %1406 = vmatprep.subr.mxu0 0.0
      %1407 = vmatpush1.msra.mxu0 0.0
      %1408 = vmatprep.subr.mxu0 0.0
      %1409 = vmatpush1.msra.mxu0 0.0
      %1410 = vmatprep.subr.mxu0 0.0
      %1411 = vmatpush1.msra.mxu0 0.0
      %1412 = vmatprep.subr.mxu0 0.0
      %1413 = vmatpush1.msra.mxu0 0.0
      %1414 = vmatprep.subr.mxu0 0.0
      %1415 = vmatpush1.msra.mxu0 0.0
      %1416 = vmatprep.subr.mxu0 0.0
      %1417 = vmatpush1.msra.mxu0 0.0
      %1418 = vmatprep.subr.mxu0 %v1384
      %1419 = vmatpush1.msra.mxu0 %v1382
      %1420 = vmatprep.subr.mxu0 0.0
      %1421 = vmatpush2.msra.mxu0 0.0
      %1422 = vmatprep.subr.mxu0 0.0
      %1423 = vmatpush2.msra.mxu0 0.0
      %1424 = vmatprep.subr.mxu0 0.0
      %1425 = vmatpush2.msra.mxu0 0.0
      %1426 = vmatprep.subr.mxu0 0.0
      %1427 = vmatpush2.msra.mxu0 0.0
      %1428 = vmatprep.subr.mxu0 0.0
      %1429 = vmatpush2.msra.mxu0 0.0
      %1430 = vmatprep.subr.mxu0 0.0
      %1431 = vmatpush2.msra.mxu0 0.0
      %1432 = vmatprep.subr.mxu0 0.0
      %1433 = vmatpush2.msra.mxu0 0.0
      %1434 = vmatprep.subr.mxu0 0.0
      %1435 = vmatpush2.msra.mxu0 0.0
      %1436 = vmatprep.subr.mxu0 0.0
      %1437 = vmatpush2.msra.mxu0 0.0
      %1438 = vmatprep.subr.mxu0 0.0
      %1439 = vmatpush2.msra.mxu0 0.0
      %1440 = vmatprep.subr.mxu0 0.0
      %1441 = vmatpush2.msra.mxu0 0.0
      %1442 = vmatprep.subr.mxu0 0.0
      %1443 = vmatpush2.msra.mxu0 0.0
      %1444 = vmatprep.subr.mxu0 0.0
      %1445 = vmatpush2.msra.mxu0 0.0
      %1446 = vmatprep.subr.mxu0 0.0
      %1447 = vmatpush2.msra.mxu0 0.0
      %1448 = vmatprep.subr.mxu0 0.0
      %1449 = vmatpush2.msra.mxu0 0.0
      %1450 = vmatprep.subr.mxu0 0.0
      %1451 = vmatpush2.msra.mxu0 0.0
      %1452 = vmatprep.mubr.f32.mxu0 0.0
      %1453 = vmatmul.mubr.f32.gmra.mxu0 %v1380
      %v1454 = vpop.f32.mrf.mxu0
      %v1455 = vadd.f32 0.0, %v1454
      %v1456 = vpop.f32.mrf.mxu0
      %v1457 = vadd.f32 0.0, %v1456
      %1458 = vdwg.mxu0
      %1459 = vmatprep.subr.mxu0 0.0
      %1460 = vmatpush1.msra.mxu0 0.0
      %1461 = vmatprep.subr.mxu0 0.0
      %1462 = vmatpush1.msra.mxu0 0.0
      %1463 = vmatprep.subr.mxu0 0.0
      %1464 = vmatpush1.msra.mxu0 0.0
      %1465 = vmatprep.subr.mxu0 0.0
      %1466 = vmatpush1.msra.mxu0 0.0
      %1467 = vmatprep.subr.mxu0 0.0
      %1468 = vmatpush1.msra.mxu0 0.0
      %1469 = vmatprep.subr.mxu0 0.0
      %1470 = vmatpush1.msra.mxu0 0.0
      %1471 = vmatprep.subr.mxu0 0.0
      %1472 = vmatpush1.msra.mxu0 0.0
      %1473 = vmatprep.subr.mxu0 0.0
      %1474 = vmatpush1.msra.mxu0 0.0
      %1475 = vmatprep.subr.mxu0 0.0
      %1476 = vmatpush1.msra.mxu0 0.0
      %1477 = vmatprep.subr.mxu0 0.0
      %1478 = vmatpush1.msra.mxu0 0.0
      %1479 = vmatprep.subr.mxu0 0.0
      %1480 = vmatpush1.msra.mxu0 0.0
      %1481 = vmatprep.subr.mxu0 0.0
      %1482 = vmatpush1.msra.mxu0 0.0
      %1483 = vmatprep.subr.mxu0 0.0
      %1484 = vmatpush1.msra.mxu0 0.0
      %1485 = vmatprep.subr.mxu0 0.0
      %1486 = vmatpush1.msra.mxu0 0.0
      %1487 = vmatprep.subr.mxu0 0.0
      %1488 = vmatpush1.msra.mxu0 0.0
      %1489 = vmatprep.subr.mxu0 0.0
      %1490 = vmatpush1.msra.mxu0 %v1386
      %1491 = vmatprep.subr.mxu0 0.0
      %1492 = vmatpush2.msra.mxu0 0.0
      %1493 = vmatprep.subr.mxu0 0.0
      %1494 = vmatpush2.msra.mxu0 0.0
      %1495 = vmatprep.subr.mxu0 0.0
      %1496 = vmatpush2.msra.mxu0 0.0
      %1497 = vmatprep.subr.mxu0 0.0
      %1498 = vmatpush2.msra.mxu0 0.0
      %1499 = vmatprep.subr.mxu0 0.0
      %1500 = vmatpush2.msra.mxu0 0.0
      %1501 = vmatprep.subr.mxu0 0.0
      %1502 = vmatpush2.msra.mxu0 0.0
      %1503 = vmatprep.subr.mxu0 0.0
      %1504 = vmatpush2.msra.mxu0 0.0
      %1505 = vmatprep.subr.mxu0 0.0
      %1506 = vmatpush2.msra.mxu0 0.0
      %1507 = vmatprep.subr.mxu0 0.0
      %1508 = vmatpush2.msra.mxu0 0.0
      %1509 = vmatprep.subr.mxu0 0.0
      %1510 = vmatpush2.msra.mxu0 0.0
      %1511 = vmatprep.subr.mxu0 0.0
      %1512 = vmatpush2.msra.mxu0 0.0
      %1513 = vmatprep.subr.mxu0 0.0
      %1514 = vmatpush2.msra.mxu0 0.0
      %1515 = vmatprep.subr.mxu0 0.0
      %1516 = vmatpush2.msra.mxu0 0.0
      %1517 = vmatprep.subr.mxu0 0.0
      %1518 = vmatpush2.msra.mxu0 0.0
      %1519 = vmatprep.subr.mxu0 0.0
      %1520 = vmatpush2.msra.mxu0 0.0
      %1521 = vmatprep.subr.mxu0 0.0
      %1522 = vmatpush2.msra.mxu0 0.0
      %1523 = vmatprep.mubr.f32.mxu0 0.0
      %1524 = vmatmul.mubr.f32.gmra.mxu0 %v1380
      %v1525 = vpop.f32.mrf.mxu0
      %v1526 = vadd.f32 0.0, %v1525
      %v1527 = vpop.f32.mrf.mxu0
      %1528 = vdwg.mxu0
      %v1529 = vadd.f32 %v1360, %v1455
      %v1530 = vadd.f32 %v1361, %v1457
      %v1531 = vadd.f32 %v1362, %v1526
      %v1532 = vld [vmem:[%s193] sm:$0xff]
      %v1533 = vld [vmem:[%s193 + $0x8] sm:$0xf]
      %s1534 = scalar_lea.vmem %s1, 64
      %v1535 = vld [vmem:[%s1534] sm:$0xff]
      %v1538 = vcombine.high %v1532, %v1532
      %1539 = vrot.lane.b32.xlu0 %v1532, 90
      %v1540 = vpop.permute.xlu0 %1539
      %1541 = vrot.lane.b32.xlu0 %v1538, 90
      %v1542 = vpop.permute.xlu0 %1541
      %1543 = vrot.lane.b32.xlu0 %v1533, 90
      %v1544 = vpop.permute.xlu0 %1543
      %vm1545 = vcmask 736256
      %v1546 = vsel %vm1545, %v1540, %v1542
      %v1547 = vsel %vm1545, %v1542, %v1544
      %v1549 = vsel %vm216, %v1535, 0
      %v1551 = vsel %vm220, %v1546, 0
      %v1553 = vsel %vm220, %v1547, 0
      %v1555 = vsel %vm220, %v1544, 0
      %1557 = vmatprep.subr.mxu0 0.0
      %1558 = vmatpush1.msra.mxu0 0.0
      %1559 = vmatprep.subr.mxu0 0.0
      %1560 = vmatpush1.msra.mxu0 0.0
      %1561 = vmatprep.subr.mxu0 0.0
      %1562 = vmatpush1.msra.mxu0 0.0
      %1563 = vmatprep.subr.mxu0 0.0
      %1564 = vmatpush1.msra.mxu0 0.0
      %1565 = vmatprep.subr.mxu0 0.0
      %1566 = vmatpush1.msra.mxu0 0.0
      %1567 = vmatprep.subr.mxu0 0.0
      %1568 = vmatpush1.msra.mxu0 0.0
      %1569 = vmatprep.subr.mxu0 0.0
      %1570 = vmatpush1.msra.mxu0 0.0
      %1571 = vmatprep.subr.mxu0 0.0
      %1572 = vmatpush1.msra.mxu0 0.0
      %1573 = vmatprep.subr.mxu0 0.0
      %1574 = vmatpush1.msra.mxu0 0.0
      %1575 = vmatprep.subr.mxu0 0.0
      %1576 = vmatpush1.msra.mxu0 0.0
      %1577 = vmatprep.subr.mxu0 0.0
      %1578 = vmatpush1.msra.mxu0 0.0
      %1579 = vmatprep.subr.mxu0 0.0
      %1580 = vmatpush1.msra.mxu0 0.0
      %1581 = vmatprep.subr.mxu0 0.0
      %1582 = vmatpush1.msra.mxu0 0.0
      %1583 = vmatprep.subr.mxu0 0.0
      %1584 = vmatpush1.msra.mxu0 0.0
      %1585 = vmatprep.subr.mxu0 0.0
      %1586 = vmatpush1.msra.mxu0 0.0
      %1587 = vmatprep.subr.mxu0 %v1553
      %1588 = vmatpush1.msra.mxu0 %v1551
      %1589 = vmatprep.subr.mxu0 0.0
      %1590 = vmatpush2.msra.mxu0 0.0
      %1591 = vmatprep.subr.mxu0 0.0
      %1592 = vmatpush2.msra.mxu0 0.0
      %1593 = vmatprep.subr.mxu0 0.0
      %1594 = vmatpush2.msra.mxu0 0.0
      %1595 = vmatprep.subr.mxu0 0.0
      %1596 = vmatpush2.msra.mxu0 0.0
      %1597 = vmatprep.subr.mxu0 0.0
      %1598 = vmatpush2.msra.mxu0 0.0
      %1599 = vmatprep.subr.mxu0 0.0
      %1600 = vmatpush2.msra.mxu0 0.0
      %1601 = vmatprep.subr.mxu0 0.0
      %1602 = vmatpush2.msra.mxu0 0.0
      %1603 = vmatprep.subr.mxu0 0.0
      %1604 = vmatpush2.msra.mxu0 0.0
      %1605 = vmatprep.subr.mxu0 0.0
      %1606 = vmatpush2.msra.mxu0 0.0
      %1607 = vmatprep.subr.mxu0 0.0
      %1608 = vmatpush2.msra.mxu0 0.0
      %1609 = vmatprep.subr.mxu0 0.0
      %1610 = vmatpush2.msra.mxu0 0.0
      %1611 = vmatprep.subr.mxu0 0.0
      %1612 = vmatpush2.msra.mxu0 0.0
      %1613 = vmatprep.subr.mxu0 0.0
      %1614 = vmatpush2.msra.mxu0 0.0
      %1615 = vmatprep.subr.mxu0 0.0
      %1616 = vmatpush2.msra.mxu0 0.0
      %1617 = vmatprep.subr.mxu0 0.0
      %1618 = vmatpush2.msra.mxu0 0.0
      %1619 = vmatprep.subr.mxu0 0.0
      %1620 = vmatpush2.msra.mxu0 0.0
      %1621 = vmatprep.mubr.f32.mxu0 0.0
      %1622 = vmatmul.mubr.f32.gmra.mxu0 %v1549
      %v1623 = vpop.f32.mrf.mxu0
      %v1624 = vadd.f32 0.0, %v1623
      %v1625 = vpop.f32.mrf.mxu0
      %v1626 = vadd.f32 0.0, %v1625
      %1627 = vdwg.mxu0
      %1628 = vmatprep.subr.mxu0 0.0
      %1629 = vmatpush1.msra.mxu0 0.0
      %1630 = vmatprep.subr.mxu0 0.0
      %1631 = vmatpush1.msra.mxu0 0.0
      %1632 = vmatprep.subr.mxu0 0.0
      %1633 = vmatpush1.msra.mxu0 0.0
      %1634 = vmatprep.subr.mxu0 0.0
      %1635 = vmatpush1.msra.mxu0 0.0
      %1636 = vmatprep.subr.mxu0 0.0
      %1637 = vmatpush1.msra.mxu0 0.0
      %1638 = vmatprep.subr.mxu0 0.0
      %1639 = vmatpush1.msra.mxu0 0.0
      %1640 = vmatprep.subr.mxu0 0.0
      %1641 = vmatpush1.msra.mxu0 0.0
      %1642 = vmatprep.subr.mxu0 0.0
      %1643 = vmatpush1.msra.mxu0 0.0
      %1644 = vmatprep.subr.mxu0 0.0
      %1645 = vmatpush1.msra.mxu0 0.0
      %1646 = vmatprep.subr.mxu0 0.0
      %1647 = vmatpush1.msra.mxu0 0.0
      %1648 = vmatprep.subr.mxu0 0.0
      %1649 = vmatpush1.msra.mxu0 0.0
      %1650 = vmatprep.subr.mxu0 0.0
      %1651 = vmatpush1.msra.mxu0 0.0
      %1652 = vmatprep.subr.mxu0 0.0
      %1653 = vmatpush1.msra.mxu0 0.0
      %1654 = vmatprep.subr.mxu0 0.0
      %1655 = vmatpush1.msra.mxu0 0.0
      %1656 = vmatprep.subr.mxu0 0.0
      %1657 = vmatpush1.msra.mxu0 0.0
      %1658 = vmatprep.subr.mxu0 0.0
      %1659 = vmatpush1.msra.mxu0 %v1555
      %1660 = vmatprep.subr.mxu0 0.0
      %1661 = vmatpush2.msra.mxu0 0.0
      %1662 = vmatprep.subr.mxu0 0.0
      %1663 = vmatpush2.msra.mxu0 0.0
      %1664 = vmatprep.subr.mxu0 0.0
      %1665 = vmatpush2.msra.mxu0 0.0
      %1666 = vmatprep.subr.mxu0 0.0
      %1667 = vmatpush2.msra.mxu0 0.0
      %1668 = vmatprep.subr.mxu0 0.0
      %1669 = vmatpush2.msra.mxu0 0.0
      %1670 = vmatprep.subr.mxu0 0.0
      %1671 = vmatpush2.msra.mxu0 0.0
      %1672 = vmatprep.subr.mxu0 0.0
      %1673 = vmatpush2.msra.mxu0 0.0
      %1674 = vmatprep.subr.mxu0 0.0
      %1675 = vmatpush2.msra.mxu0 0.0
      %1676 = vmatprep.subr.mxu0 0.0
      %1677 = vmatpush2.msra.mxu0 0.0
      %1678 = vmatprep.subr.mxu0 0.0
      %1679 = vmatpush2.msra.mxu0 0.0
      %1680 = vmatprep.subr.mxu0 0.0
      %1681 = vmatpush2.msra.mxu0 0.0
      %1682 = vmatprep.subr.mxu0 0.0
      %1683 = vmatpush2.msra.mxu0 0.0
      %1684 = vmatprep.subr.mxu0 0.0
      %1685 = vmatpush2.msra.mxu0 0.0
      %1686 = vmatprep.subr.mxu0 0.0
      %1687 = vmatpush2.msra.mxu0 0.0
      %1688 = vmatprep.subr.mxu0 0.0
      %1689 = vmatpush2.msra.mxu0 0.0
      %1690 = vmatprep.subr.mxu0 0.0
      %1691 = vmatpush2.msra.mxu0 0.0
      %1692 = vmatprep.mubr.f32.mxu0 0.0
      %1693 = vmatmul.mubr.f32.gmra.mxu0 %v1549
      %v1694 = vpop.f32.mrf.mxu0
      %v1695 = vadd.f32 0.0, %v1694
      %v1696 = vpop.f32.mrf.mxu0
      %1697 = vdwg.mxu0
      %v1698 = vadd.f32 %v1529, %v1624
      %v1699 = vadd.f32 %v1530, %v1626
      %v1700 = vadd.f32 %v1531, %v1695
      %v1701 = vld [vmem:[%s2] sm:$0xff]
      %1703 = vset.pattern.permute.xlu0 0
      %1704 = vperm.xlu0 %1703, %v1701
      %v1705 = vpop.permute.xlu0 %1704
      %v1707 = vadd.f32 %v1698, %v1705
      %v1708 = vadd.f32 %v1699, %v1705
      %v1709 = vadd.f32 %v1700, %v1705
      %s1710 = sld [smem:[#allocation2]]
      %vm1711 = vcmp.ge.f32.partialorder %v1707, 0.0
      %vm1712 = vcmp.ge.f32.partialorder %v1708, 0.0
      %vm1713 = vcmp.ge.f32.partialorder %v1709, 0.0
      %v1714 = vstv %s1710
      %v1715 = vmul.f32 %v1714, %v1707
      %v1716 = vmul.f32 %v1714, %v1708
      %v1717 = vmul.f32 %v1714, %v1709
      %v1718 = vsel %vm1711, %v1707, %v1715
      %v1719 = vsel %vm1712, %v1708, %v1716
      %v1720 = vsel %vm1713, %v1709, %v1717
      %1721 = vst [vmem:[%s198] sm:$0xff] %v1718
      %1722 = vst [vmem:[%s198 + $0x8] sm:$0xff] %v1719
      %vm1723 = vcmask 261120
      %1724 = vst.msk [vmem:[%s198 + $0x10] sm:$0xff] %vm1723, %v1720
      %p1725 = scmp.lt.s32.totalorder %s16, 1
      %s1726 = scalar_select %p1725, %s16, 1
      %s1727 = smul.addr %s1726, 3
      %s1728 = smul.addr %s1727, 8
      %s1729 = scalar_lea.vmem %s4, %s1728
      // Predicated region
      $region37: #{lidar_head_forward.1} parent=35 // pred_check
        %p1730 = pneg %p123
      $region38: #{lidar_head_forward.1} parent=35 // pred_check_branch
        %1732 = sbr.rel (%p1730) target = $region40
      $region39: #{lidar_head_forward.1} parent=35 // pred_region
        _
      $region40: #{lidar_head_forward.1} parent=35 // pred_fallthru
        _
    $region36: #{lidar_head_forward.1} parent=5 // pred_fallthru
      _
    %p1733 = scmp.le.s32.totalorder 2, %s11
    // Predicated region
    $region41: #{lidar_head_forward.1} parent=5 // pred_check
      %p1734 = pneg %p1733
    $region42: #{lidar_head_forward.1} parent=5 // pred_check_branch
      %1736 = sbr.rel (%p1734) target = $region44
    $region43: #{lidar_head_forward.1} parent=5 // pred_region
      %s1737 = ssub.s32 %s11, 2
      // Predicated region
      $region45: #{lidar_head_forward.1} parent=43 // pred_check
        %p1738 = pneg %p129
      $region46: #{lidar_head_forward.1} parent=43 // pred_check_branch
        %1740 = sbr.rel (%p1738) target = $region48
      $region47: #{lidar_head_forward.1} parent=43 // pred_region
        %p1741 = scmp.lt.s32.totalorder %s17, 1
        %s1742 = scalar_select %p1741, %s17, 1
        %s1743 = smul.addr %s1742, 3
        %s1744 = smul.addr %s1743, 8
        %s1745 = scalar_lea.vmem %s4, %s1744
      $region48: #{lidar_head_forward.1} parent=43 // pred_fallthru
        _
    $region44: #{lidar_head_forward.1} parent=5 // pred_fallthru
      _
  $region6: #{lidar_head_forward.1} parent=0 // loop_footer
    %s15 = sadd.s32 1, %s11
  $region7: #{lidar_head_forward.1} parent=0 // loop_footer_branch
    %10 = sbr.rel target = $region3
  $region8: #{lidar_head_forward.1} parent=0 // loop_exit
    _

</llo_original>
